<compile_context>
chip_gen: v6e
topology: v6e:2x2x1
jax: 0.10.0
libtpu: 0.0.40
codegen_flags: <defaults>
</compile_context>

<pallas_src>
import jax
import jax.numpy as jnp
from jax.experimental import pallas as pl
from jax.experimental.pallas import tpu as pltpu

INPUT_SIZE = 28 * 28      # 784; sublane-aligned (98 * 8), no contraction padding needed
LATENT_DIM = 20
N_PAD = 128               # lane-dense width for the final 20-wide output
BN_EPS = 1e-5


def encoder_kernel(x_ref, w1_ref, w2_ref, w3_ref, w4_ref, b_ref, o_ref):
    """One batch tile through the whole BN-folded MLP; activations never leave vregs/VMEM."""
    # Layer 1: (TM, 784) @ (784, 512).  x arrives f32; cheap VPU cast to bf16 for the MXU.
    h = jnp.dot(x_ref[...].astype(jnp.bfloat16), w1_ref[...],
                preferred_element_type=jnp.float32)
    h = jnp.maximum(h + b_ref[0:1, 0:512], 0.0)
    # TODO(synk): Dropout(p=0.2) is a train-mode stochastic op; eval-mode forward is identity.

    # Layer 2: (TM, 512) @ (512, 256)
    h = jnp.dot(h.astype(jnp.bfloat16), w2_ref[...], preferred_element_type=jnp.float32)
    h = jnp.maximum(h + b_ref[1:2, 0:256], 0.0)

    # Layer 3: (TM, 256) @ (256, 128)
    h = jnp.dot(h.astype(jnp.bfloat16), w3_ref[...], preferred_element_type=jnp.float32)
    h = jnp.maximum(h + b_ref[2:3, 0:128], 0.0)

    # Layer 4: (TM, 128) @ (128, 128)  -- final {Linear, BatchNorm} has no ReLU
    h = jnp.dot(h.astype(jnp.bfloat16), w4_ref[...], preferred_element_type=jnp.float32)
    o_ref[...] = (h + b_ref[3:4, 0:N_PAD]).astype(o_ref.dtype)


def _fold_bn(w, b, gamma, beta, mean, var, eps=BN_EPS):
    """Fold eval-mode BatchNorm1d into the preceding Linear (numerically exact)."""
    scale = gamma * jax.lax.rsqrt(var + eps)
    return w * scale[None, :], (b - mean) * scale + beta


def prepare_params(params):
    """One-time preprocessing (outside the per-call jit): fold BN, pad the final
    layer's N to 128, cast weights to bf16, and pack the four f32 biases into a
    single (4, 512) operand (one resident DMA instead of four)."""
    (w1, b1), (w2, b2), (w3, b3), (w4, b4) = [_fold_bn(*p) for p in params]
    w4 = jnp.pad(w4, ((0, 0), (0, N_PAD - w4.shape[1])))
    b4 = jnp.pad(b4, (0, N_PAD - b4.shape[0]))
    b_pack = jnp.stack([jnp.pad(bb, (0, 512 - bb.shape[0]))
                        for bb in (b1, b2, b3, b4)]).astype(jnp.float32)
    bf16 = lambda a: a.astype(jnp.bfloat16)
    return (bf16(w1), bf16(w2), bf16(w3), bf16(w4), b_pack)


def _pick_tile(batch):
    """Batch-tile size: 256 saturates the MXU on v5e/v6e/v7x; small batches just
    round up to sublane alignment (8)."""
    if batch >= 256:
        return 256
    return max(8, ((batch + 7) // 8) * 8)


@jax.jit
def encoder_forward(x, prepared):
    w1, w2, w3, w4, b_pack = prepared
    B = x.shape[0]
    tm = _pick_tile(B)
    b_pad = pl.cdiv(B, tm) * tm
    if b_pad != B:
        x = jnp.pad(x, ((0, b_pad - B), (0, 0)))

    const = lambda i: (0, 0)   # weights/biases: same block every grid step -> resident
    out_pad = pl.pallas_call(
        encoder_kernel,
        out_shape=jax.ShapeDtypeStruct((b_pad, N_PAD), jnp.float32),
        grid=(b_pad // tm,),
        in_specs=[
            pl.BlockSpec((tm, INPUT_SIZE), lambda i: (i, 0)),   # x (f32, tiled over batch)
            pl.BlockSpec((INPUT_SIZE, 512), const),             # W1 (bf16, resident)
            pl.BlockSpec((512, 256), const),                    # W2
            pl.BlockSpec((256, 128), const),                    # W3
            pl.BlockSpec((128, N_PAD), const),                  # W4 (N padded to 128)
            pl.BlockSpec((4, 512), const),                      # packed folded biases (f32)
        ],
        out_specs=pl.BlockSpec((tm, N_PAD), lambda i: (i, 0)),
        compiler_params=pltpu.CompilerParams(
            dimension_semantics=("parallel",)),                 # v7x: shard batch across TCs
    )(x, w1, w2, w3, w4, b_pack)

    return out_pad[:B, :LATENT_DIM]


def encoder_reference(x, params, eps=BN_EPS):
    """Pure-JAX f32 eval-mode reference (Linear -> BN(running stats) -> ReLU)."""
    h = x
    n = len(params)
    for i, (w, b, g, be, m, v) in enumerate(params):
        h = h @ w + b
        h = (h - m) * (g * jax.lax.rsqrt(v + eps)) + be
        if i < n - 1:
            h = jnp.maximum(h, 0.0)
    return h


def init_params(key, input_size=INPUT_SIZE, latent_dim=LATENT_DIM):
    """Deterministic synthetic parameters matching the module's shapes."""
    dims = [input_size, 512, 256, 128, latent_dim]
    params = []
    for i in range(4):
        fan_in, fan_out = dims[i], dims[i + 1]
        key, k1, k2, k3, k4, k5, k6 = jax.random.split(key, 7)
        bound = 1.0 / (fan_in ** 0.5)          # PyTorch Linear init range
        w = jax.random.uniform(k1, (fan_in, fan_out), jnp.float32, -bound, bound)
        b = jax.random.uniform(k2, (fan_out,), jnp.float32, -bound, bound)
        gamma = 1.0 + 0.1 * jax.random.normal(k3, (fan_out,), jnp.float32)
        beta = 0.1 * jax.random.normal(k4, (fan_out,), jnp.float32)
        run_mean = 0.1 * jax.random.normal(k5, (fan_out,), jnp.float32)
        run_var = jnp.abs(1.0 + 0.1 * jax.random.normal(k6, (fan_out,), jnp.float32))
        params.append((w, b, gamma, beta, run_mean, run_var))
    return params


if __name__ == "__main__":
    key = jax.random.PRNGKey(0)
    kx, kp, kx2 = jax.random.split(key, 3)

    params = init_params(kp, INPUT_SIZE, LATENT_DIM)
    prepared = jax.tree_util.tree_map(jax.block_until_ready, prepare_params(params))

    # Small batch (single tile, padded-to-8 path).
    B = 8
    x = jax.random.normal(kx, (B, INPUT_SIZE), jnp.float32)
    out = jax.block_until_ready(encoder_forward(x, prepared))
    ref = encoder_reference(x, params)
    assert out.shape == (B, LATENT_DIM), out.shape
    assert bool(jnp.all(jnp.isfinite(out)))
    max_err = float(jnp.max(jnp.abs(out - ref)))
    assert max_err < 0.2, f"max |err| vs f32 reference (B=8) = {max_err}"

    # Larger batch to exercise the multi-tile grid + batch padding path (TM=256).
    B2 = 300
    x2 = jax.random.normal(kx2, (B2, INPUT_SIZE), jnp.float32)
    out2 = jax.block_until_ready(encoder_forward(x2, prepared))
    ref2 = encoder_reference(x2, params)
    assert out2.shape == (B2, LATENT_DIM), out2.shape
    assert bool(jnp.all(jnp.isfinite(out2)))
    max_err2 = float(jnp.max(jnp.abs(out2 - ref2)))
    assert max_err2 < 0.2, f"max |err| vs f32 reference (B=300) = {max_err2}"

    print("KERNEL_OK")
</pallas_src>

<mosaic_0001>
module attributes {stable_mosaic.version = 11 : i64} {
  func.func @encoder_kernel(%arg0: i32, %arg1: memref<8x784xf32, #tpu.memory_space<vmem>>, %arg2: memref<784x512xbf16, #tpu.memory_space<vmem>>, %arg3: memref<512x256xbf16, #tpu.memory_space<vmem>>, %arg4: memref<256x128xbf16, #tpu.memory_space<vmem>>, %arg5: memref<128x128xbf16, #tpu.memory_space<vmem>>, %arg6: memref<4x512xf32, #tpu.memory_space<vmem>>, %arg7: memref<8x128xf32, #tpu.memory_space<vmem>>) attributes {dimension_semantics = [#tpu.dimension_semantics<parallel>], iteration_bounds = array<i64: 1>, scalar_prefetch = 0 : i64, scratch_operands = 0 : i64, tpu.core_type = #tpu.core_type<tc>, window_params = [{transform_indices = @transform_0, window_bounds = array<i64: 8, 784>}, {pipeline_mode = #tpu.pipeline_mode<synchronous>, transform_indices = @transform_1, window_bounds = array<i64: 784, 512>}, {pipeline_mode = #tpu.pipeline_mode<synchronous>, transform_indices = @transform_2, window_bounds = array<i64: 512, 256>}, {pipeline_mode = #tpu.pipeline_mode<synchronous>, transform_indices = @transform_3, window_bounds = array<i64: 256, 128>}, {pipeline_mode = #tpu.pipeline_mode<synchronous>, transform_indices = @transform_4, window_bounds = array<i64: 128, 128>}, {pipeline_mode = #tpu.pipeline_mode<synchronous>, transform_indices = @transform_5, window_bounds = array<i64: 4, 512>}, {transform_indices = @transform_6, window_bounds = array<i64: 8, 128>}]} {
    %c0 = arith.constant 0 : index
    %c0_0 = arith.constant 0 : index
    %0 = vector.load %arg1[%c0, %c0_0] : memref<8x784xf32, #tpu.memory_space<vmem>>, vector<8x784xf32>
    %1 = arith.truncf %0 : vector<8x784xf32> to vector<8x784xbf16>
    %c0_1 = arith.constant 0 : index
    %c0_2 = arith.constant 0 : index
    %2 = vector.load %arg2[%c0_1, %c0_2] : memref<784x512xbf16, #tpu.memory_space<vmem>>, vector<784x512xbf16>
    %cst = arith.constant dense<0.000000e+00> : vector<8x512xf32>
    %3 = tpu.matmul %1, %2, %cst {dimension_numbers = #tpu.dot_dimension_numbers<[1], [0], [0], [1], [0, 0, 1, 1], [], []>} : vector<8x784xbf16>, vector<784x512xbf16>, vector<8x512xf32> -> vector<8x512xf32>
    %c0_3 = arith.constant 0 : index
    %c0_4 = arith.constant 0 : index
    %4 = vector.load %arg6[%c0_3, %c0_4] : memref<4x512xf32, #tpu.memory_space<vmem>>, vector<1x512xf32>
    %5 = vector.broadcast %4 : vector<1x512xf32> to vector<8x512xf32>
    %6 = arith.addf %3, %5 : vector<8x512xf32>
    %cst_5 = arith.constant 0.000000e+00 : f32
    %7 = vector.broadcast %cst_5 : f32 to vector<8x512xf32>
    %8 = arith.maximumf %6, %7 : vector<8x512xf32>
    %9 = arith.truncf %8 : vector<8x512xf32> to vector<8x512xbf16>
    %c0_6 = arith.constant 0 : index
    %c0_7 = arith.constant 0 : index
    %10 = vector.load %arg3[%c0_6, %c0_7] : memref<512x256xbf16, #tpu.memory_space<vmem>>, vector<512x256xbf16>
    %cst_8 = arith.constant dense<0.000000e+00> : vector<8x256xf32>
    %11 = tpu.matmul %9, %10, %cst_8 {dimension_numbers = #tpu.dot_dimension_numbers<[1], [0], [0], [1], [0, 0, 1, 1], [], []>} : vector<8x512xbf16>, vector<512x256xbf16>, vector<8x256xf32> -> vector<8x256xf32>
    %c1 = arith.constant 1 : index
    %c0_9 = arith.constant 0 : index
    %12 = vector.load %arg6[%c1, %c0_9] : memref<4x512xf32, #tpu.memory_space<vmem>>, vector<1x256xf32>
    %13 = vector.broadcast %12 : vector<1x256xf32> to vector<8x256xf32>
    %14 = arith.addf %11, %13 : vector<8x256xf32>
    %cst_10 = arith.constant 0.000000e+00 : f32
    %15 = vector.broadcast %cst_10 : f32 to vector<8x256xf32>
    %16 = arith.maximumf %14, %15 : vector<8x256xf32>
    %17 = arith.truncf %16 : vector<8x256xf32> to vector<8x256xbf16>
    %c0_11 = arith.constant 0 : index
    %c0_12 = arith.constant 0 : index
    %18 = vector.load %arg4[%c0_11, %c0_12] : memref<256x128xbf16, #tpu.memory_space<vmem>>, vector<256x128xbf16>
    %cst_13 = arith.constant dense<0.000000e+00> : vector<8x128xf32>
    %19 = tpu.matmul %17, %18, %cst_13 {dimension_numbers = #tpu.dot_dimension_numbers<[1], [0], [0], [1], [0, 0, 1, 1], [], []>} : vector<8x256xbf16>, vector<256x128xbf16>, vector<8x128xf32> -> vector<8x128xf32>
    %c2 = arith.constant 2 : index
    %c0_14 = arith.constant 0 : index
    %20 = vector.load %arg6[%c2, %c0_14] : memref<4x512xf32, #tpu.memory_space<vmem>>, vector<1x128xf32>
    %21 = vector.broadcast %20 : vector<1x128xf32> to vector<8x128xf32>
    %22 = arith.addf %19, %21 : vector<8x128xf32>
    %cst_15 = arith.constant 0.000000e+00 : f32
    %23 = vector.broadcast %cst_15 : f32 to vector<8x128xf32>
    %24 = arith.maximumf %22, %23 : vector<8x128xf32>
    %25 = arith.truncf %24 : vector<8x128xf32> to vector<8x128xbf16>
    %c0_16 = arith.constant 0 : index
    %c0_17 = arith.constant 0 : index
    %26 = vector.load %arg5[%c0_16, %c0_17] : memref<128x128xbf16, #tpu.memory_space<vmem>>, vector<128x128xbf16>
    %cst_18 = arith.constant dense<0.000000e+00> : vector<8x128xf32>
    %27 = tpu.matmul %25, %26, %cst_18 {dimension_numbers = #tpu.dot_dimension_numbers<[1], [0], [0], [1], [0, 0, 1, 1], [], []>} : vector<8x128xbf16>, vector<128x128xbf16>, vector<8x128xf32> -> vector<8x128xf32>
    %c3 = arith.constant 3 : index
    %c0_19 = arith.constant 0 : index
    %28 = vector.load %arg6[%c3, %c0_19] : memref<4x512xf32, #tpu.memory_space<vmem>>, vector<1x128xf32>
    %29 = vector.broadcast %28 : vector<1x128xf32> to vector<8x128xf32>
    %30 = arith.addf %27, %29 : vector<8x128xf32>
    %c0_20 = arith.constant 0 : index
    %c0_21 = arith.constant 0 : index
    %31 = vector.load %arg7[%c0_20, %c0_21] : memref<8x128xf32, #tpu.memory_space<vmem>>, vector<8x128xf32>
    tpu.vector_store %arg7[%c0_20, %c0_21], %30 {strides = array<i32>} : memref<8x128xf32, #tpu.memory_space<vmem>>, vector<8x128xf32>,
    return
  }
  func.func @transform_0(%arg0: i32) -> (i32, i32) {
    %c0_i32 = arith.constant 0 : i32
    %c0_i32_0 = arith.constant 0 : i32
    return %arg0, %c0_i32 : i32, i32
  }
  func.func @transform_1(%arg0: i32) -> (i32, i32) {
    %c0_i32 = arith.constant 0 : i32
    %c0_i32_0 = arith.constant 0 : i32
    %c0_i32_1 = arith.constant 0 : i32
    return %c0_i32, %c0_i32_0 : i32, i32
  }
  func.func @transform_2(%arg0: i32) -> (i32, i32) {
    %c0_i32 = arith.constant 0 : i32
    %c0_i32_0 = arith.constant 0 : i32
    %c0_i32_1 = arith.constant 0 : i32
    return %c0_i32, %c0_i32_0 : i32, i32
  }
  func.func @transform_3(%arg0: i32) -> (i32, i32) {
    %c0_i32 = arith.constant 0 : i32
    %c0_i32_0 = arith.constant 0 : i32
    %c0_i32_1 = arith.constant 0 : i32
    return %c0_i32, %c0_i32_0 : i32, i32
  }
  func.func @transform_4(%arg0: i32) -> (i32, i32) {
    %c0_i32 = arith.constant 0 : i32
    %c0_i32_0 = arith.constant 0 : i32
    %c0_i32_1 = arith.constant 0 : i32
    return %c0_i32, %c0_i32_0 : i32, i32
  }
  func.func @transform_5(%arg0: i32) -> (i32, i32) {
    %c0_i32 = arith.constant 0 : i32
    %c0_i32_0 = arith.constant 0 : i32
    %c0_i32_1 = arith.constant 0 : i32
    return %c0_i32, %c0_i32_0 : i32, i32
  }
  func.func @transform_6(%arg0: i32) -> (i32, i32) {
    %c0_i32 = arith.constant 0 : i32
    %c0_i32_0 = arith.constant 0 : i32
    return %arg0, %c0_i32 : i32, i32
  }
}

</mosaic_0001>

<llo_original>
// kernel: encoder_forward.1
$region0: #{encoder_forward.1}
  #allocation0 [shape = 'u32[]', space=smem, size = 0x4, offset = 0x4, fixed_abs, tag = 'smem constant byte address 0x4 - core index']
  #allocation1 [shape = 'u32[144,128]{1,0:T(1,128)}', space=vmem, size = 0x12000, scoped, tag = 'internal scratch']
  %s0 = inlined_call_operand.hbm [shape: f32[8,784], index: 0, kind: input, shape index: {}]
  %s1 = inlined_call_operand.hbm [shape: bf16[784,512], index: 1, kind: input, shape index: {}]
  %s2 = inlined_call_operand.hbm [shape: bf16[512,256], index: 2, kind: input, shape index: {}]
  %s3 = inlined_call_operand.hbm [shape: bf16[256,128], index: 3, kind: input, shape index: {}]
  %s4 = inlined_call_operand.hbm [shape: bf16[128,128], index: 4, kind: input, shape index: {}]
  %s5 = inlined_call_operand.hbm [shape: f32[4,512], index: 5, kind: input, shape index: {}]
  %s6 = inlined_call_operand.hbm [shape: f32[8,128], index: 6, kind: output, shape index: {}]
  %s7 = sld [smem:[#allocation0]]
  $region58: #{encoder_forward.1} parent=0
    _
  %s9 = ssub.s32 1, %s7
  %s10 = scalar_select 0, %s9, %s7
  $region1: #{encoder_forward.1} parent=0
    #allocation2 [shape = 'u8[28672]{0}', space=vmem, size = 0x7000, scoped, tag = 'input window, operand 0, single buffered']
    #allocation3 [shape = 's32[1]{0}', space=sflag, size = 0x4, scoped, tag = 'scoped memory for encoder_forward.1']
    #allocation4 [shape = 's32[1]{0}', space=sflag, size = 0x4, scoped, tag = 'scoped memory for encoder_forward.1']
    #allocation5 [shape = 'u8[802816]{0}', space=vmem, size = 0xc4000, scoped, tag = 'input window, operand 1, single buffered']
    #allocation6 [shape = 's32[1]{0}', space=sflag, size = 0x4, scoped, tag = 'scoped memory for encoder_forward.1']
    #allocation7 [shape = 'u8[262144]{0}', space=vmem, size = 0x40000, scoped, tag = 'input window, operand 2, single buffered']
    #allocation8 [shape = 'u8[65536]{0}', space=vmem, size = 0x10000, scoped, tag = 'input window, operand 3, single buffered']
    #allocation9 [shape = 's32[1]{0}', space=sflag, size = 0x4, scoped, tag = 'scoped memory for encoder_forward.1']
    #allocation10 [shape = 'u8[32768]{0}', space=vmem, size = 0x8000, scoped, tag = 'input window, operand 4, single buffered']
    #allocation11 [shape = 'u8[8192]{0}', space=vmem, size = 0x2000, scoped, tag = 'input window, operand 5, single buffered']
    #allocation12 [shape = 's32[1]{0}', space=sflag, size = 0x4, scoped, tag = 'scoped memory for encoder_forward.1']
    #allocation13 [shape = 'u8[4096]{0}', space=vmem, size = 0x1000, scoped, tag = 'output window, operand 0, single buffered']
    %11 = vsyncpa [#allocation3], 0
    %12 = vsyncpa [#allocation6], 0
    %13 = vsyncpa [#allocation9], 0
    %14 = vsyncpa [#allocation12], 0
    %15 = vsyncpa [#allocation4], 0
    // Predicated region
    $region2: #{encoder_forward.1} parent=1 // pred_check
      _
    $region3: #{encoder_forward.1} parent=1 // pred_check_branch
      %17 = sbr.rel (0) target = $region5
    $region4: #{encoder_forward.1} parent=1 // pred_region
      %s19 = ssub.s32 896, 896
      %20 = vsyncadd [#allocation3], %s19
      %s22 = sshll.u32 [#allocation2], 4
      %s23 = int_to_ptr.vmem [resolvable:$true] %s22
      %25 = dma.hbm_to_vmem [thread:$0]  %s0, 896, %s23, [#allocation3]
    $region5: #{encoder_forward.1} parent=1 // pred_fallthru
      _
    // Predicated region
    $region6: #{encoder_forward.1} parent=1 // pred_check
      _
    $region7: #{encoder_forward.1} parent=1 // pred_check_branch
      %27 = sbr.rel (0) target = $region9
    $region8: #{encoder_forward.1} parent=1 // pred_region
      %s29 = ssub.s32 25088, 25088
      %30 = vsyncadd [#allocation6], %s29
      %s31 = sshll.u32 [#allocation5], 4
      %s32 = int_to_ptr.vmem [resolvable:$true] %s31
      %37 = dma.hbm_to_vmem [thread:$0]  %s1, 25088, %s32, [#allocation6], 256, 256, 16
    $region9: #{encoder_forward.1} parent=1 // pred_fallthru
      _
    // Predicated region
    $region10: #{encoder_forward.1} parent=1 // pred_check
      _
    $region11: #{encoder_forward.1} parent=1 // pred_check_branch
      %39 = sbr.rel (0) target = $region13
    $region12: #{encoder_forward.1} parent=1 // pred_region
      %s41 = ssub.s32 8192, 8192
      %42 = vsyncadd [#allocation6], %s41
      %s43 = sshll.u32 [#allocation7], 4
      %s44 = int_to_ptr.vmem [resolvable:$true] %s43
      %49 = dma.hbm_to_vmem [thread:$0]  %s2, 8192, %s44, [#allocation6], 128, 128, 8
    $region13: #{encoder_forward.1} parent=1 // pred_fallthru
      _
    // Predicated region
    $region14: #{encoder_forward.1} parent=1 // pred_check
      _
    $region15: #{encoder_forward.1} parent=1 // pred_check_branch
      %51 = sbr.rel (0) target = $region17
    $region16: #{encoder_forward.1} parent=1 // pred_region
      %s53 = ssub.s32 2048, 2048
      %54 = vsyncadd [#allocation9], %s53
      %s55 = sshll.u32 [#allocation8], 4
      %s56 = int_to_ptr.vmem [resolvable:$true] %s55
      %61 = dma.hbm_to_vmem [thread:$0]  %s3, 2048, %s56, [#allocation9], 64, 64, 4
    $region17: #{encoder_forward.1} parent=1 // pred_fallthru
      _
    // Predicated region
    $region18: #{encoder_forward.1} parent=1 // pred_check
      _
    $region19: #{encoder_forward.1} parent=1 // pred_check_branch
      %63 = sbr.rel (0) target = $region21
    $region20: #{encoder_forward.1} parent=1 // pred_region
      %s65 = ssub.s32 1024, 1024
      %66 = vsyncadd [#allocation9], %s65
      %s67 = sshll.u32 [#allocation10], 4
      %s68 = int_to_ptr.vmem [resolvable:$true] %s67
      %73 = dma.hbm_to_vmem [thread:$0]  %s4, 1024, %s68, [#allocation9], 64, 64, 4
    $region21: #{encoder_forward.1} parent=1 // pred_fallthru
      _
    // Predicated region
    $region22: #{encoder_forward.1} parent=1 // pred_check
      _
    $region23: #{encoder_forward.1} parent=1 // pred_check_branch
      %75 = sbr.rel (0) target = $region25
    $region24: #{encoder_forward.1} parent=1 // pred_region
      %s77 = ssub.s32 256, 256
      %78 = vsyncadd [#allocation12], %s77
      %s80 = sshll.u32 [#allocation11], 4
      %s81 = int_to_ptr.vmem [resolvable:$true] %s80
      %83 = dma.hbm_to_vmem [thread:$0]  %s5, 256, %s81, [#allocation12]
    $region25: #{encoder_forward.1} parent=1 // pred_fallthru
      _
    // Predicated region
    $region26: #{encoder_forward.1} parent=1 // pred_check
      _
    $region27: #{encoder_forward.1} parent=1 // pred_check_branch
      %85 = sbr.rel (0) target = $region29
    $region28: #{encoder_forward.1} parent=1 // pred_region
      %86 = dma.done [#allocation3], 896
    $region29: #{encoder_forward.1} parent=1 // pred_fallthru
      _
    // Predicated region
    $region30: #{encoder_forward.1} parent=1 // pred_check
      _
    $region31: #{encoder_forward.1} parent=1 // pred_check_branch
      %88 = sbr.rel (0) target = $region33
    $region32: #{encoder_forward.1} parent=1 // pred_region
      %89 = dma.done [#allocation6], 25088
    $region33: #{encoder_forward.1} parent=1 // pred_fallthru
      _
    // Predicated region
    $region34: #{encoder_forward.1} parent=1 // pred_check
      _
    $region35: #{encoder_forward.1} parent=1 // pred_check_branch
      %91 = sbr.rel (0) target = $region37
    $region36: #{encoder_forward.1} parent=1 // pred_region
      %92 = dma.done [#allocation6], 8192
    $region37: #{encoder_forward.1} parent=1 // pred_fallthru
      _
    // Predicated region
    $region38: #{encoder_forward.1} parent=1 // pred_check
      _
    $region39: #{encoder_forward.1} parent=1 // pred_check_branch
      %94 = sbr.rel (0) target = $region41
    $region40: #{encoder_forward.1} parent=1 // pred_region
      %95 = dma.done [#allocation9], 2048
    $region41: #{encoder_forward.1} parent=1 // pred_fallthru
      _
    // Predicated region
    $region42: #{encoder_forward.1} parent=1 // pred_check
      _
    $region43: #{encoder_forward.1} parent=1 // pred_check_branch
      %97 = sbr.rel (0) target = $region45
    $region44: #{encoder_forward.1} parent=1 // pred_region
      %98 = dma.done [#allocation9], 1024
    $region45: #{encoder_forward.1} parent=1 // pred_fallthru
      _
    // Predicated region
    $region46: #{encoder_forward.1} parent=1 // pred_check
      _
    $region47: #{encoder_forward.1} parent=1 // pred_check_branch
      %100 = sbr.rel (0) target = $region49
    $region48: #{encoder_forward.1} parent=1 // pred_region
      %101 = dma.done [#allocation12], 256
    $region49: #{encoder_forward.1} parent=1 // pred_fallthru
      _
    %v103 = vld [vmem:[#allocation2] sm:$0xff]
    %v104 = vld [vmem:[#allocation2 + $0x8] sm:$0xff]
    %v105 = vld [vmem:[#allocation2 + $0x10] sm:$0xff]
    %v106 = vld [vmem:[#allocation2 + $0x18] sm:$0xff]
    %v107 = vld [vmem:[#allocation2 + $0x20] sm:$0xff]
    %v108 = vld [vmem:[#allocation2 + $0x28] sm:$0xff]
    %v109 = vld [vmem:[#allocation2 + $0x30] sm:$0xff]
    %v110 = vpack.c.bf16 %v103, %v103
    %v111 = vpack.c.bf16 %v104, %v104
    %v112 = vpack.c.bf16 %v105, %v105
    %v113 = vpack.c.bf16 %v106, %v106
    %v114 = vpack.c.bf16 %v107, %v107
    %v115 = vpack.c.bf16 %v108, %v108
    %v116 = vpack.c.bf16 %v109, %v109
    %v117 = vld [vmem:[#allocation5] sm:$0xff]
    %v118 = vld [vmem:[#allocation5 + $0x8] sm:$0xff]
    %v119 = vld [vmem:[#allocation5 + $0x10] sm:$0xff]
    %v120 = vld [vmem:[#allocation5 + $0x18] sm:$0xff]
    %v121 = vld [vmem:[#allocation5 + $0x20] sm:$0xff]
    %v122 = vld [vmem:[#allocation5 + $0x28] sm:$0xff]
    %v123 = vld [vmem:[#allocation5 + $0x30] sm:$0xff]
    %v124 = vld [vmem:[#allocation5 + $0x38] sm:$0xff]
    %v125 = vld [vmem:[#allocation5 + $0x40] sm:$0xff]
    %v126 = vld [vmem:[#allocation5 + $0x48] sm:$0xff]
    %v127 = vld [vmem:[#allocation5 + $0x50] sm:$0xff]
    %v128 = vld [vmem:[#allocation5 + $0x58] sm:$0xff]
    %v129 = vld [vmem:[#allocation5 + $0x60] sm:$0xff]
    %v130 = vld [vmem:[#allocation5 + $0x68] sm:$0xff]
    %v131 = vld [vmem:[#allocation5 + $0x70] sm:$0xff]
    %v132 = vld [vmem:[#allocation5 + $0x78] sm:$0xff]
    %v133 = vld [vmem:[#allocation5 + $0x80] sm:$0xff]
    %v134 = vld [vmem:[#allocation5 + $0x88] sm:$0xff]
    %v135 = vld [vmem:[#allocation5 + $0x90] sm:$0xff]
    %v136 = vld [vmem:[#allocation5 + $0x98] sm:$0xff]
    %v137 = vld [vmem:[#allocation5 + $0xa0] sm:$0xff]
    %v138 = vld [vmem:[#allocation5 + $0xa8] sm:$0xff]
    %v139 = vld [vmem:[#allocation5 + $0xb0] sm:$0xff]
    %v140 = vld [vmem:[#allocation5 + $0xb8] sm:$0xff]
    %v141 = vld [vmem:[#allocation5 + $0xc0] sm:$0xff]
    %v142 = vld [vmem:[#allocation5 + $0xc8] sm:$0xff]
    %v143 = vld [vmem:[#allocation5 + $0xd0] sm:$0xff]
    %v144 = vld [vmem:[#allocation5 + $0xd8] sm:$0xff]
    %v145 = vld [vmem:[#allocation5 + $0xe0] sm:$0xff]
    %v146 = vld [vmem:[#allocation5 + $0xe8] sm:$0xff]
    %v147 = vld [vmem:[#allocation5 + $0xf0] sm:$0xff]
    %v148 = vld [vmem:[#allocation5 + $0xf8] sm:$0xff]
    %v149 = vld [vmem:[#allocation5 + $0x100] sm:$0xff]
    %v150 = vld [vmem:[#allocation5 + $0x108] sm:$0xff]
    %v151 = vld [vmem:[#allocation5 + $0x110] sm:$0xff]
    %v152 = vld [vmem:[#allocation5 + $0x118] sm:$0xff]
    %v153 = vld [vmem:[#allocation5 + $0x120] sm:$0xff]
    %v154 = vld [vmem:[#allocation5 + $0x128] sm:$0xff]
    %v155 = vld [vmem:[#allocation5 + $0x130] sm:$0xff]
    %v156 = vld [vmem:[#allocation5 + $0x138] sm:$0xff]
    %v157 = vld [vmem:[#allocation5 + $0x140] sm:$0xff]
    %v158 = vld [vmem:[#allocation5 + $0x148] sm:$0xff]
    %v159 = vld [vmem:[#allocation5 + $0x150] sm:$0xff]
    %v160 = vld [vmem:[#allocation5 + $0x158] sm:$0xff]
    %v161 = vld [vmem:[#allocation5 + $0x160] sm:$0xff]
    %v162 = vld [vmem:[#allocation5 + $0x168] sm:$0xff]
    %v163 = vld [vmem:[#allocation5 + $0x170] sm:$0xff]
    %v164 = vld [vmem:[#allocation5 + $0x178] sm:$0xff]
    %v165 = vld [vmem:[#allocation5 + $0x180] sm:$0xff]
    %v166 = vld [vmem:[#allocation5 + $0x188] sm:$0xff]
    %v167 = vld [vmem:[#allocation5 + $0x190] sm:$0xff]
    %v168 = vld [vmem:[#allocation5 + $0x198] sm:$0xff]
    %v169 = vld [vmem:[#allocation5 + $0x1a0] sm:$0xff]
    %v170 = vld [vmem:[#allocation5 + $0x1a8] sm:$0xff]
    %v171 = vld [vmem:[#allocation5 + $0x1b0] sm:$0xff]
    %v172 = vld [vmem:[#allocation5 + $0x1b8] sm:$0xff]
    %v173 = vld [vmem:[#allocation5 + $0x1c0] sm:$0xff]
    %v174 = vld [vmem:[#allocation5 + $0x1c8] sm:$0xff]
    %v175 = vld [vmem:[#allocation5 + $0x1d0] sm:$0xff]
    %v176 = vld [vmem:[#allocation5 + $0x1d8] sm:$0xff]
    %v177 = vld [vmem:[#allocation5 + $0x1e0] sm:$0xff]
    %v178 = vld [vmem:[#allocation5 + $0x1e8] sm:$0xff]
    %v179 = vld [vmem:[#allocation5 + $0x1f0] sm:$0xff]
    %v180 = vld [vmem:[#allocation5 + $0x1f8] sm:$0xff]
    %v181 = vld [vmem:[#allocation5 + $0x200] sm:$0xff]
    %v182 = vld [vmem:[#allocation5 + $0x208] sm:$0xff]
    %v183 = vld [vmem:[#allocation5 + $0x210] sm:$0xff]
    %v184 = vld [vmem:[#allocation5 + $0x218] sm:$0xff]
    %v185 = vld [vmem:[#allocation5 + $0x220] sm:$0xff]
    %v186 = vld [vmem:[#allocation5 + $0x228] sm:$0xff]
    %v187 = vld [vmem:[#allocation5 + $0x230] sm:$0xff]
    %v188 = vld [vmem:[#allocation5 + $0x238] sm:$0xff]
    %v189 = vld [vmem:[#allocation5 + $0x240] sm:$0xff]
    %v190 = vld [vmem:[#allocation5 + $0x248] sm:$0xff]
    %v191 = vld [vmem:[#allocation5 + $0x250] sm:$0xff]
    %v192 = vld [vmem:[#allocation5 + $0x258] sm:$0xff]
    %v193 = vld [vmem:[#allocation5 + $0x260] sm:$0xff]
    %v194 = vld [vmem:[#allocation5 + $0x268] sm:$0xff]
    %v195 = vld [vmem:[#allocation5 + $0x270] sm:$0xff]
    %v196 = vld [vmem:[#allocation5 + $0x278] sm:$0xff]
    %v197 = vld [vmem:[#allocation5 + $0x280] sm:$0xff]
    %v198 = vld [vmem:[#allocation5 + $0x288] sm:$0xff]
    %v199 = vld [vmem:[#allocation5 + $0x290] sm:$0xff]
    %v200 = vld [vmem:[#allocation5 + $0x298] sm:$0xff]
    %v201 = vld [vmem:[#allocation5 + $0x2a0] sm:$0xff]
    %v202 = vld [vmem:[#allocation5 + $0x2a8] sm:$0xff]
    %v203 = vld [vmem:[#allocation5 + $0x2b0] sm:$0xff]
    %v204 = vld [vmem:[#allocation5 + $0x2b8] sm:$0xff]
    %v205 = vld [vmem:[#allocation5 + $0x2c0] sm:$0xff]
    %v206 = vld [vmem:[#allocation5 + $0x2c8] sm:$0xff]
    %v207 = vld [vmem:[#allocation5 + $0x2d0] sm:$0xff]
    %v208 = vld [vmem:[#allocation5 + $0x2d8] sm:$0xff]
    %v209 = vld [vmem:[#allocation5 + $0x2e0] sm:$0xff]
    %v210 = vld [vmem:[#allocation5 + $0x2e8] sm:$0xff]
    %v211 = vld [vmem:[#allocation5 + $0x2f0] sm:$0xff]
    %v212 = vld [vmem:[#allocation5 + $0x2f8] sm:$0xff]
    %v213 = vld [vmem:[#allocation5 + $0x300] sm:$0xff]
    %v214 = vld [vmem:[#allocation5 + $0x308] sm:$0xff]
    %v215 = vld [vmem:[#allocation5 + $0x310] sm:$0xff]
    %v216 = vld [vmem:[#allocation5 + $0x318] sm:$0xff]
    %v217 = vld [vmem:[#allocation5 + $0x320] sm:$0xff]
    %v218 = vld [vmem:[#allocation5 + $0x328] sm:$0xff]
    %v219 = vld [vmem:[#allocation5 + $0x330] sm:$0xff]
    %v220 = vld [vmem:[#allocation5 + $0x338] sm:$0xff]
    %v221 = vld [vmem:[#allocation5 + $0x340] sm:$0xff]
    %v222 = vld [vmem:[#allocation5 + $0x348] sm:$0xff]
    %v223 = vld [vmem:[#allocation5 + $0x350] sm:$0xff]
    %v224 = vld [vmem:[#allocation5 + $0x358] sm:$0xff]
    %v225 = vld [vmem:[#allocation5 + $0x360] sm:$0xff]
    %v226 = vld [vmem:[#allocation5 + $0x368] sm:$0xff]
    %v227 = vld [vmem:[#allocation5 + $0x370] sm:$0xff]
    %v228 = vld [vmem:[#allocation5 + $0x378] sm:$0xff]
    %v229 = vld [vmem:[#allocation5 + $0x380] sm:$0xff]
    %v230 = vld [vmem:[#allocation5 + $0x388] sm:$0xff]
    %v231 = vld [vmem:[#allocation5 + $0x390] sm:$0xff]
    %v232 = vld [vmem:[#allocation5 + $0x398] sm:$0xff]
    %v233 = vld [vmem:[#allocation5 + $0x3a0] sm:$0xff]
    %v234 = vld [vmem:[#allocation5 + $0x3a8] sm:$0xff]
    %v235 = vld [vmem:[#allocation5 + $0x3b0] sm:$0xff]
    %v236 = vld [vmem:[#allocation5 + $0x3b8] sm:$0xff]
    %v237 = vld [vmem:[#allocation5 + $0x3c0] sm:$0xff]
    %v238 = vld [vmem:[#allocation5 + $0x3c8] sm:$0xff]
    %v239 = vld [vmem:[#allocation5 + $0x3d0] sm:$0xff]
    %v240 = vld [vmem:[#allocation5 + $0x3d8] sm:$0xff]
    %v241 = vld [vmem:[#allocation5 + $0x3e0] sm:$0xff]
    %v242 = vld [vmem:[#allocation5 + $0x3e8] sm:$0xff]
    %v243 = vld [vmem:[#allocation5 + $0x3f0] sm:$0xff]
    %v244 = vld [vmem:[#allocation5 + $0x3f8] sm:$0xff]
    %v245 = vld [vmem:[#allocation5 + $0x400] sm:$0xff]
    %v246 = vld [vmem:[#allocation5 + $0x408] sm:$0xff]
    %v247 = vld [vmem:[#allocation5 + $0x410] sm:$0xff]
    %v248 = vld [vmem:[#allocation5 + $0x418] sm:$0xff]
    %v249 = vld [vmem:[#allocation5 + $0x420] sm:$0xff]
    %v250 = vld [vmem:[#allocation5 + $0x428] sm:$0xff]
    %v251 = vld [vmem:[#allocation5 + $0x430] sm:$0xff]
    %v252 = vld [vmem:[#allocation5 + $0x438] sm:$0xff]
    %v253 = vld [vmem:[#allocation5 + $0x440] sm:$0xff]
    %v254 = vld [vmem:[#allocation5 + $0x448] sm:$0xff]
    %v255 = vld [vmem:[#allocation5 + $0x450] sm:$0xff]
    %v256 = vld [vmem:[#allocation5 + $0x458] sm:$0xff]
    %v257 = vld [vmem:[#allocation5 + $0x460] sm:$0xff]
    %v258 = vld [vmem:[#allocation5 + $0x468] sm:$0xff]
    %v259 = vld [vmem:[#allocation5 + $0x470] sm:$0xff]
    %v260 = vld [vmem:[#allocation5 + $0x478] sm:$0xff]
    %v261 = vld [vmem:[#allocation5 + $0x480] sm:$0xff]
    %v262 = vld [vmem:[#allocation5 + $0x488] sm:$0xff]
    %v263 = vld [vmem:[#allocation5 + $0x490] sm:$0xff]
    %v264 = vld [vmem:[#allocation5 + $0x498] sm:$0xff]
    %v265 = vld [vmem:[#allocation5 + $0x4a0] sm:$0xff]
    %v266 = vld [vmem:[#allocation5 + $0x4a8] sm:$0xff]
    %v267 = vld [vmem:[#allocation5 + $0x4b0] sm:$0xff]
    %v268 = vld [vmem:[#allocation5 + $0x4b8] sm:$0xff]
    %v269 = vld [vmem:[#allocation5 + $0x4c0] sm:$0xff]
    %v270 = vld [vmem:[#allocation5 + $0x4c8] sm:$0xff]
    %v271 = vld [vmem:[#allocation5 + $0x4d0] sm:$0xff]
    %v272 = vld [vmem:[#allocation5 + $0x4d8] sm:$0xff]
    %v273 = vld [vmem:[#allocation5 + $0x4e0] sm:$0xff]
    %v274 = vld [vmem:[#allocation5 + $0x4e8] sm:$0xff]
    %v275 = vld [vmem:[#allocation5 + $0x4f0] sm:$0xff]
    %v276 = vld [vmem:[#allocation5 + $0x4f8] sm:$0xff]
    %v277 = vld [vmem:[#allocation5 + $0x500] sm:$0xff]
    %v278 = vld [vmem:[#allocation5 + $0x508] sm:$0xff]
    %v279 = vld [vmem:[#allocation5 + $0x510] sm:$0xff]
    %v280 = vld [vmem:[#allocation5 + $0x518] sm:$0xff]
    %v281 = vld [vmem:[#allocation5 + $0x520] sm:$0xff]
    %v282 = vld [vmem:[#allocation5 + $0x528] sm:$0xff]
    %v283 = vld [vmem:[#allocation5 + $0x530] sm:$0xff]
    %v284 = vld [vmem:[#allocation5 + $0x538] sm:$0xff]
    %v285 = vld [vmem:[#allocation5 + $0x540] sm:$0xff]
    %v286 = vld [vmem:[#allocation5 + $0x548] sm:$0xff]
    %v287 = vld [vmem:[#allocation5 + $0x550] sm:$0xff]
    %v288 = vld [vmem:[#allocation5 + $0x558] sm:$0xff]
    %v289 = vld [vmem:[#allocation5 + $0x560] sm:$0xff]
    %v290 = vld [vmem:[#allocation5 + $0x568] sm:$0xff]
    %v291 = vld [vmem:[#allocation5 + $0x570] sm:$0xff]
    %v292 = vld [vmem:[#allocation5 + $0x578] sm:$0xff]
    %v293 = vld [vmem:[#allocation5 + $0x580] sm:$0xff]
    %v294 = vld [vmem:[#allocation5 + $0x588] sm:$0xff]
    %v295 = vld [vmem:[#allocation5 + $0x590] sm:$0xff]
    %v296 = vld [vmem:[#allocation5 + $0x598] sm:$0xff]
    %v297 = vld [vmem:[#allocation5 + $0x5a0] sm:$0xff]
    %v298 = vld [vmem:[#allocation5 + $0x5a8] sm:$0xff]
    %v299 = vld [vmem:[#allocation5 + $0x5b0] sm:$0xff]
    %v300 = vld [vmem:[#allocation5 + $0x5b8] sm:$0xff]
    %v301 = vld [vmem:[#allocation5 + $0x5c0] sm:$0xff]
    %v302 = vld [vmem:[#allocation5 + $0x5c8] sm:$0xff]
    %v303 = vld [vmem:[#allocation5 + $0x5d0] sm:$0xff]
    %v304 = vld [vmem:[#allocation5 + $0x5d8] sm:$0xff]
    %v305 = vld [vmem:[#allocation5 + $0x5e0] sm:$0xff]
    %v306 = vld [vmem:[#allocation5 + $0x5e8] sm:$0xff]
    %v307 = vld [vmem:[#allocation5 + $0x5f0] sm:$0xff]
    %v308 = vld [vmem:[#allocation5 + $0x5f8] sm:$0xff]
    %v309 = vld [vmem:[#allocation5 + $0x600] sm:$0xff]
    %v310 = vld [vmem:[#allocation5 + $0x608] sm:$0xff]
    %v311 = vld [vmem:[#allocation5 + $0x610] sm:$0xff]
    %v312 = vld [vmem:[#allocation5 + $0x618] sm:$0xff]
    %v313 = vld [vmem:[#allocation11] ss:$4 sm:$0xf]
    %v315 = vlaneseq
    %v316 = vshrl.u32 %v315, 7
    %v317 = vsub.s32 0, %v316
    %v318 = vrot.slane %v313, %v317
    %v319 = vlaneseq
    %v320 = vshrl.u32 %v319, 7
    %v321 = vsub.s32 1, %v320
    %v322 = vrot.slane %v313, %v321
    %v323 = vlaneseq
    %v324 = vshrl.u32 %v323, 7
    %v325 = vsub.s32 2, %v324
    %v326 = vrot.slane %v313, %v325
    %v327 = vlaneseq
    %v328 = vshrl.u32 %v327, 7
    %v329 = vsub.s32 3, %v328
    %v330 = vrot.slane %v313, %v329
    %v531 = vunpack.c.l.b16 %v117
    %v532 = vunpack.c.h.b16 %v117
    %v533 = vunpack.c.l.b16 %v118
    %v534 = vunpack.c.h.b16 %v118
    %v535 = vunpack.c.l.b16 %v119
    %v536 = vunpack.c.h.b16 %v119
    %v537 = vunpack.c.l.b16 %v120
    %v538 = vunpack.c.h.b16 %v120
    %v539 = vunpack.c.l.b16 %v121
    %v540 = vunpack.c.h.b16 %v121
    %v541 = vunpack.c.l.b16 %v122
    %v542 = vunpack.c.h.b16 %v122
    %v543 = vunpack.c.l.b16 %v123
    %v544 = vunpack.c.h.b16 %v123
    %v545 = vunpack.c.l.b16 %v124
    %v546 = vunpack.c.h.b16 %v124
    %v547 = vunpack.c.l.b16 %v125
    %v548 = vunpack.c.h.b16 %v125
    %v549 = vunpack.c.l.b16 %v126
    %v550 = vunpack.c.h.b16 %v126
    %v551 = vunpack.c.l.b16 %v127
    %v552 = vunpack.c.h.b16 %v127
    %v553 = vunpack.c.l.b16 %v128
    %v554 = vunpack.c.h.b16 %v128
    %v555 = vunpack.c.l.b16 %v129
    %v556 = vunpack.c.h.b16 %v129
    %v557 = vunpack.c.l.b16 %v130
    %v558 = vunpack.c.h.b16 %v130
    %v559 = vunpack.c.l.b16 %v131
    %v560 = vunpack.c.h.b16 %v131
    %v561 = vunpack.c.l.b16 %v132
    %v562 = vunpack.c.h.b16 %v132
    %v563 = vunpack.c.l.b16 %v133
    %v564 = vunpack.c.h.b16 %v133
    %v565 = vunpack.c.l.b16 %v134
    %v566 = vunpack.c.h.b16 %v134
    %v567 = vunpack.c.l.b16 %v135
    %v568 = vunpack.c.h.b16 %v135
    %v569 = vunpack.c.l.b16 %v136
    %v570 = vunpack.c.h.b16 %v136
    %v571 = vunpack.c.l.b16 %v137
    %v572 = vunpack.c.h.b16 %v137
    %v573 = vunpack.c.l.b16 %v138
    %v574 = vunpack.c.h.b16 %v138
    %v575 = vunpack.c.l.b16 %v139
    %v576 = vunpack.c.h.b16 %v139
    %v577 = vunpack.c.l.b16 %v140
    %v578 = vunpack.c.h.b16 %v140
    %v579 = vunpack.c.l.b16 %v141
    %v580 = vunpack.c.h.b16 %v141
    %v581 = vunpack.c.l.b16 %v142
    %v582 = vunpack.c.h.b16 %v142
    %v583 = vunpack.c.l.b16 %v143
    %v584 = vunpack.c.h.b16 %v143
    %v585 = vunpack.c.l.b16 %v144
    %v586 = vunpack.c.h.b16 %v144
    %v587 = vunpack.c.l.b16 %v145
    %v588 = vunpack.c.h.b16 %v145
    %v589 = vunpack.c.l.b16 %v146
    %v590 = vunpack.c.h.b16 %v146
    %v591 = vunpack.c.l.b16 %v147
    %v592 = vunpack.c.h.b16 %v147
    %v593 = vunpack.c.l.b16 %v148
    %v594 = vunpack.c.h.b16 %v148
    %v595 = vunpack.c.l.b16 %v149
    %v596 = vunpack.c.h.b16 %v149
    %v597 = vunpack.c.l.b16 %v150
    %v598 = vunpack.c.h.b16 %v150
    %v599 = vunpack.c.l.b16 %v151
    %v600 = vunpack.c.h.b16 %v151
    %v601 = vunpack.c.l.b16 %v152
    %v602 = vunpack.c.h.b16 %v152
    %v603 = vunpack.c.l.b16 %v153
    %v604 = vunpack.c.h.b16 %v153
    %v605 = vunpack.c.l.b16 %v154
    %v606 = vunpack.c.h.b16 %v154
    %v607 = vunpack.c.l.b16 %v155
    %v608 = vunpack.c.h.b16 %v155
    %v609 = vunpack.c.l.b16 %v156
    %v610 = vunpack.c.h.b16 %v156
    %v611 = vunpack.c.l.b16 %v157
    %v612 = vunpack.c.h.b16 %v157
    %v613 = vunpack.c.l.b16 %v158
    %v614 = vunpack.c.h.b16 %v158
    %v615 = vunpack.c.l.b16 %v159
    %v616 = vunpack.c.h.b16 %v159
    %v617 = vunpack.c.l.b16 %v160
    %v618 = vunpack.c.h.b16 %v160
    %v619 = vunpack.c.l.b16 %v161
    %v620 = vunpack.c.h.b16 %v161
    %v621 = vunpack.c.l.b16 %v162
    %v622 = vunpack.c.h.b16 %v162
    %v623 = vunpack.c.l.b16 %v163
    %v624 = vunpack.c.h.b16 %v163
    %v625 = vunpack.c.l.b16 %v164
    %v626 = vunpack.c.h.b16 %v164
    %v627 = vunpack.c.l.b16 %v165
    %v628 = vunpack.c.h.b16 %v165
    %v629 = vunpack.c.l.b16 %v166
    %v630 = vunpack.c.h.b16 %v166
    %v631 = vunpack.c.l.b16 %v167
    %v632 = vunpack.c.h.b16 %v167
    %v633 = vunpack.c.l.b16 %v168
    %v634 = vunpack.c.h.b16 %v168
    %v635 = vunpack.c.l.b16 %v169
    %v636 = vunpack.c.h.b16 %v169
    %v637 = vunpack.c.l.b16 %v170
    %v638 = vunpack.c.h.b16 %v170
    %v639 = vunpack.c.l.b16 %v171
    %v640 = vunpack.c.h.b16 %v171
    %v641 = vunpack.c.l.b16 %v172
    %v642 = vunpack.c.h.b16 %v172
    %v643 = vunpack.c.l.b16 %v173
    %v644 = vunpack.c.h.b16 %v173
    %v645 = vunpack.c.l.b16 %v174
    %v646 = vunpack.c.h.b16 %v174
    %v647 = vunpack.c.l.b16 %v175
    %v648 = vunpack.c.h.b16 %v175
    %v649 = vunpack.c.l.b16 %v176
    %v650 = vunpack.c.h.b16 %v176
    %v651 = vunpack.c.l.b16 %v177
    %v652 = vunpack.c.h.b16 %v177
    %v653 = vunpack.c.l.b16 %v178
    %v654 = vunpack.c.h.b16 %v178
    %v655 = vunpack.c.l.b16 %v179
    %v656 = vunpack.c.h.b16 %v179
    %v657 = vunpack.c.l.b16 %v180
    %v658 = vunpack.c.h.b16 %v180
    %v659 = vunpack.c.l.b16 %v181
    %v660 = vunpack.c.h.b16 %v181
    %v661 = vunpack.c.l.b16 %v182
    %v662 = vunpack.c.h.b16 %v182
    %v663 = vunpack.c.l.b16 %v183
    %v664 = vunpack.c.h.b16 %v183
    %v665 = vunpack.c.l.b16 %v184
    %v666 = vunpack.c.h.b16 %v184
    %v667 = vunpack.c.l.b16 %v185
    %v668 = vunpack.c.h.b16 %v185
    %v669 = vunpack.c.l.b16 %v186
    %v670 = vunpack.c.h.b16 %v186
    %v671 = vunpack.c.l.b16 %v187
    %v672 = vunpack.c.h.b16 %v187
    %v673 = vunpack.c.l.b16 %v188
    %v674 = vunpack.c.h.b16 %v188
    %v675 = vunpack.c.l.b16 %v189
    %v676 = vunpack.c.h.b16 %v189
    %v677 = vunpack.c.l.b16 %v190
    %v678 = vunpack.c.h.b16 %v190
    %v679 = vunpack.c.l.b16 %v191
    %v680 = vunpack.c.h.b16 %v191
    %v681 = vunpack.c.l.b16 %v192
    %v682 = vunpack.c.h.b16 %v192
    %v683 = vunpack.c.l.b16 %v193
    %v684 = vunpack.c.h.b16 %v193
    %v685 = vunpack.c.l.b16 %v194
    %v686 = vunpack.c.h.b16 %v194
    %v687 = vunpack.c.l.b16 %v195
    %v688 = vunpack.c.h.b16 %v195
    %v689 = vunpack.c.l.b16 %v196
    %v690 = vunpack.c.h.b16 %v196
    %v691 = vunpack.c.l.b16 %v197
    %v692 = vunpack.c.h.b16 %v197
    %v693 = vunpack.c.l.b16 %v198
    %v694 = vunpack.c.h.b16 %v198
    %v695 = vunpack.c.l.b16 %v199
    %v696 = vunpack.c.h.b16 %v199
    %v697 = vunpack.c.l.b16 %v200
    %v698 = vunpack.c.h.b16 %v200
    %v699 = vunpack.c.l.b16 %v201
    %v700 = vunpack.c.h.b16 %v201
    %v701 = vunpack.c.l.b16 %v202
    %v702 = vunpack.c.h.b16 %v202
    %v703 = vunpack.c.l.b16 %v203
    %v704 = vunpack.c.h.b16 %v203
    %v705 = vunpack.c.l.b16 %v204
    %v706 = vunpack.c.h.b16 %v204
    %v707 = vunpack.c.l.b16 %v205
    %v708 = vunpack.c.h.b16 %v205
    %v709 = vunpack.c.l.b16 %v206
    %v710 = vunpack.c.h.b16 %v206
    %v711 = vunpack.c.l.b16 %v207
    %v712 = vunpack.c.h.b16 %v207
    %v713 = vunpack.c.l.b16 %v208
    %v714 = vunpack.c.h.b16 %v208
    %v715 = vunpack.c.l.b16 %v209
    %v716 = vunpack.c.h.b16 %v209
    %v717 = vunpack.c.l.b16 %v210
    %v718 = vunpack.c.h.b16 %v210
    %v719 = vunpack.c.l.b16 %v211
    %v720 = vunpack.c.h.b16 %v211
    %v721 = vunpack.c.l.b16 %v212
    %v722 = vunpack.c.h.b16 %v212
    %v723 = vunpack.c.l.b16 %v213
    %v724 = vunpack.c.h.b16 %v213
    %v725 = vunpack.c.l.b16 %v214
    %v726 = vunpack.c.h.b16 %v214
    %v727 = vunpack.c.l.b16 %v215
    %v728 = vunpack.c.h.b16 %v215
    %v729 = vunpack.c.l.b16 %v216
    %v730 = vunpack.c.h.b16 %v216
    %v731 = vunpack.c.l.b16 %v217
    %v732 = vunpack.c.h.b16 %v217
    %v733 = vunpack.c.l.b16 %v218
    %v734 = vunpack.c.h.b16 %v218
    %v735 = vunpack.c.l.b16 %v219
    %v736 = vunpack.c.h.b16 %v219
    %v737 = vunpack.c.l.b16 %v220
    %v738 = vunpack.c.h.b16 %v220
    %v739 = vunpack.c.l.b16 %v221
    %v740 = vunpack.c.h.b16 %v221
    %v741 = vunpack.c.l.b16 %v222
    %v742 = vunpack.c.h.b16 %v222
    %v743 = vunpack.c.l.b16 %v223
    %v744 = vunpack.c.h.b16 %v223
    %v745 = vunpack.c.l.b16 %v224
    %v746 = vunpack.c.h.b16 %v224
    %v747 = vunpack.c.l.b16 %v225
    %v748 = vunpack.c.h.b16 %v225
    %v749 = vunpack.c.l.b16 %v226
    %v750 = vunpack.c.h.b16 %v226
    %v751 = vunpack.c.l.b16 %v227
    %v752 = vunpack.c.h.b16 %v227
    %v753 = vunpack.c.l.b16 %v228
    %v754 = vunpack.c.h.b16 %v228
    %v755 = vunpack.c.l.b16 %v229
    %v756 = vunpack.c.h.b16 %v229
    %v757 = vunpack.c.l.b16 %v230
    %v758 = vunpack.c.h.b16 %v230
    %v759 = vunpack.c.l.b16 %v231
    %v760 = vunpack.c.h.b16 %v231
    %v761 = vunpack.c.l.b16 %v232
    %v762 = vunpack.c.h.b16 %v232
    %v763 = vunpack.c.l.b16 %v233
    %v764 = vunpack.c.h.b16 %v233
    %v765 = vunpack.c.l.b16 %v234
    %v766 = vunpack.c.h.b16 %v234
    %v767 = vunpack.c.l.b16 %v235
    %v768 = vunpack.c.h.b16 %v235
    %v769 = vunpack.c.l.b16 %v236
    %v770 = vunpack.c.h.b16 %v236
    %v771 = vunpack.c.l.b16 %v237
    %v772 = vunpack.c.h.b16 %v237
    %v773 = vunpack.c.l.b16 %v238
    %v774 = vunpack.c.h.b16 %v238
    %v775 = vunpack.c.l.b16 %v239
    %v776 = vunpack.c.h.b16 %v239
    %v777 = vunpack.c.l.b16 %v240
    %v778 = vunpack.c.h.b16 %v240
    %v779 = vunpack.c.l.b16 %v241
    %v780 = vunpack.c.h.b16 %v241
    %v781 = vunpack.c.l.b16 %v242
    %v782 = vunpack.c.h.b16 %v242
    %v783 = vunpack.c.l.b16 %v243
    %v784 = vunpack.c.h.b16 %v243
    %v785 = vunpack.c.l.b16 %v244
    %v786 = vunpack.c.h.b16 %v244
    %v787 = vunpack.c.l.b16 %v245
    %v788 = vunpack.c.h.b16 %v245
    %v789 = vunpack.c.l.b16 %v246
    %v790 = vunpack.c.h.b16 %v246
    %v791 = vunpack.c.l.b16 %v247
    %v792 = vunpack.c.h.b16 %v247
    %v793 = vunpack.c.l.b16 %v248
    %v794 = vunpack.c.h.b16 %v248
    %v795 = vunpack.c.l.b16 %v249
    %v796 = vunpack.c.h.b16 %v249
    %v797 = vunpack.c.l.b16 %v250
    %v798 = vunpack.c.h.b16 %v250
    %v799 = vunpack.c.l.b16 %v251
    %v800 = vunpack.c.h.b16 %v251
    %v801 = vunpack.c.l.b16 %v252
    %v802 = vunpack.c.h.b16 %v252
    %v803 = vunpack.c.l.b16 %v253
    %v804 = vunpack.c.h.b16 %v253
    %v805 = vunpack.c.l.b16 %v254
    %v806 = vunpack.c.h.b16 %v254
    %v807 = vunpack.c.l.b16 %v255
    %v808 = vunpack.c.h.b16 %v255
    %v809 = vunpack.c.l.b16 %v256
    %v810 = vunpack.c.h.b16 %v256
    %v811 = vunpack.c.l.b16 %v257
    %v812 = vunpack.c.h.b16 %v257
    %v813 = vunpack.c.l.b16 %v258
    %v814 = vunpack.c.h.b16 %v258
    %v815 = vunpack.c.l.b16 %v259
    %v816 = vunpack.c.h.b16 %v259
    %v817 = vunpack.c.l.b16 %v260
    %v818 = vunpack.c.h.b16 %v260
    %v819 = vunpack.c.l.b16 %v261
    %v820 = vunpack.c.h.b16 %v261
    %v821 = vunpack.c.l.b16 %v262
    %v822 = vunpack.c.h.b16 %v262
    %v823 = vunpack.c.l.b16 %v263
    %v824 = vunpack.c.h.b16 %v263
    %v825 = vunpack.c.l.b16 %v264
    %v826 = vunpack.c.h.b16 %v264
    %v827 = vunpack.c.l.b16 %v265
    %v828 = vunpack.c.h.b16 %v265
    %v829 = vunpack.c.l.b16 %v266
    %v830 = vunpack.c.h.b16 %v266
    %v831 = vunpack.c.l.b16 %v267
    %v832 = vunpack.c.h.b16 %v267
    %v833 = vunpack.c.l.b16 %v268
    %v834 = vunpack.c.h.b16 %v268
    %v835 = vunpack.c.l.b16 %v269
    %v836 = vunpack.c.h.b16 %v269
    %v837 = vunpack.c.l.b16 %v270
    %v838 = vunpack.c.h.b16 %v270
    %v839 = vunpack.c.l.b16 %v271
    %v840 = vunpack.c.h.b16 %v271
    %v841 = vunpack.c.l.b16 %v272
    %v842 = vunpack.c.h.b16 %v272
    %v843 = vunpack.c.l.b16 %v273
    %v844 = vunpack.c.h.b16 %v273
    %v845 = vunpack.c.l.b16 %v274
    %v846 = vunpack.c.h.b16 %v274
    %v847 = vunpack.c.l.b16 %v275
    %v848 = vunpack.c.h.b16 %v275
    %v849 = vunpack.c.l.b16 %v276
    %v850 = vunpack.c.h.b16 %v276
    %v851 = vunpack.c.l.b16 %v277
    %v852 = vunpack.c.h.b16 %v277
    %v853 = vunpack.c.l.b16 %v278
    %v854 = vunpack.c.h.b16 %v278
    %v855 = vunpack.c.l.b16 %v279
    %v856 = vunpack.c.h.b16 %v279
    %v857 = vunpack.c.l.b16 %v280
    %v858 = vunpack.c.h.b16 %v280
    %v859 = vunpack.c.l.b16 %v281
    %v860 = vunpack.c.h.b16 %v281
    %v861 = vunpack.c.l.b16 %v282
    %v862 = vunpack.c.h.b16 %v282
    %v863 = vunpack.c.l.b16 %v283
    %v864 = vunpack.c.h.b16 %v283
    %v865 = vunpack.c.l.b16 %v284
    %v866 = vunpack.c.h.b16 %v284
    %v867 = vunpack.c.l.b16 %v285
    %v868 = vunpack.c.h.b16 %v285
    %v869 = vunpack.c.l.b16 %v286
    %v870 = vunpack.c.h.b16 %v286
    %v871 = vunpack.c.l.b16 %v287
    %v872 = vunpack.c.h.b16 %v287
    %v873 = vunpack.c.l.b16 %v288
    %v874 = vunpack.c.h.b16 %v288
    %v875 = vunpack.c.l.b16 %v289
    %v876 = vunpack.c.h.b16 %v289
    %v877 = vunpack.c.l.b16 %v290
    %v878 = vunpack.c.h.b16 %v290
    %v879 = vunpack.c.l.b16 %v291
    %v880 = vunpack.c.h.b16 %v291
    %v881 = vunpack.c.l.b16 %v292
    %v882 = vunpack.c.h.b16 %v292
    %v883 = vunpack.c.l.b16 %v293
    %v884 = vunpack.c.h.b16 %v293
    %v885 = vunpack.c.l.b16 %v294
    %v886 = vunpack.c.h.b16 %v294
    %v887 = vunpack.c.l.b16 %v295
    %v888 = vunpack.c.h.b16 %v295
    %v889 = vunpack.c.l.b16 %v296
    %v890 = vunpack.c.h.b16 %v296
    %v891 = vunpack.c.l.b16 %v297
    %v892 = vunpack.c.h.b16 %v297
    %v893 = vunpack.c.l.b16 %v298
    %v894 = vunpack.c.h.b16 %v298
    %v895 = vunpack.c.l.b16 %v299
    %v896 = vunpack.c.h.b16 %v299
    %v897 = vunpack.c.l.b16 %v300
    %v898 = vunpack.c.h.b16 %v300
    %v899 = vunpack.c.l.b16 %v301
    %v900 = vunpack.c.h.b16 %v301
    %v901 = vunpack.c.l.b16 %v302
    %v902 = vunpack.c.h.b16 %v302
    %v903 = vunpack.c.l.b16 %v303
    %v904 = vunpack.c.h.b16 %v303
    %v905 = vunpack.c.l.b16 %v304
    %v906 = vunpack.c.h.b16 %v304
    %v907 = vunpack.c.l.b16 %v305
    %v908 = vunpack.c.h.b16 %v305
    %v909 = vunpack.c.l.b16 %v306
    %v910 = vunpack.c.h.b16 %v306
    %v911 = vunpack.c.l.b16 %v307
    %v912 = vunpack.c.h.b16 %v307
    %v913 = vunpack.c.l.b16 %v308
    %v914 = vunpack.c.h.b16 %v308
    %v915 = vunpack.c.l.b16 %v309
    %v916 = vunpack.c.h.b16 %v309
    %v917 = vunpack.c.l.b16 %v310
    %v918 = vunpack.c.h.b16 %v310
    %v919 = vunpack.c.l.b16 %v311
    %v920 = vunpack.c.h.b16 %v311
    %v921 = vunpack.c.l.b16 %v312
    %v922 = vunpack.c.h.b16 %v312
    %v923 = vpack.c.b16 %v535, %v531
    %v924 = vpack.c.b16 %v536, %v532
    %v925 = vpack.c.b16 %v537, %v533
    %v926 = vpack.c.b16 %v538, %v534
    %v927 = vpack.c.b16 %v543, %v539
    %v928 = vpack.c.b16 %v544, %v540
    %v929 = vpack.c.b16 %v545, %v541
    %v930 = vpack.c.b16 %v546, %v542
    %v931 = vpack.c.b16 %v551, %v547
    %v932 = vpack.c.b16 %v552, %v548
    %v933 = vpack.c.b16 %v553, %v549
    %v934 = vpack.c.b16 %v554, %v550
    %v935 = vpack.c.b16 %v559, %v555
    %v936 = vpack.c.b16 %v560, %v556
    %v937 = vpack.c.b16 %v561, %v557
    %v938 = vpack.c.b16 %v562, %v558
    %v939 = vpack.c.b16 %v567, %v563
    %v940 = vpack.c.b16 %v568, %v564
    %v941 = vpack.c.b16 %v569, %v565
    %v942 = vpack.c.b16 %v570, %v566
    %v943 = vpack.c.b16 %v575, %v571
    %v944 = vpack.c.b16 %v576, %v572
    %v945 = vpack.c.b16 %v577, %v573
    %v946 = vpack.c.b16 %v578, %v574
    %v947 = vpack.c.b16 %v583, %v579
    %v948 = vpack.c.b16 %v584, %v580
    %v949 = vpack.c.b16 %v585, %v581
    %v950 = vpack.c.b16 %v586, %v582
    %v951 = vpack.c.b16 %v591, %v587
    %v952 = vpack.c.b16 %v592, %v588
    %v953 = vpack.c.b16 %v593, %v589
    %v954 = vpack.c.b16 %v594, %v590
    %v955 = vpack.c.b16 %v599, %v595
    %v956 = vpack.c.b16 %v600, %v596
    %v957 = vpack.c.b16 %v601, %v597
    %v958 = vpack.c.b16 %v602, %v598
    %v959 = vpack.c.b16 %v607, %v603
    %v960 = vpack.c.b16 %v608, %v604
    %v961 = vpack.c.b16 %v609, %v605
    %v962 = vpack.c.b16 %v610, %v606
    %v963 = vpack.c.b16 %v615, %v611
    %v964 = vpack.c.b16 %v616, %v612
    %v965 = vpack.c.b16 %v617, %v613
    %v966 = vpack.c.b16 %v618, %v614
    %v967 = vpack.c.b16 %v623, %v619
    %v968 = vpack.c.b16 %v624, %v620
    %v969 = vpack.c.b16 %v625, %v621
    %v970 = vpack.c.b16 %v626, %v622
    %v971 = vpack.c.b16 %v631, %v627
    %v972 = vpack.c.b16 %v632, %v628
    %v973 = vpack.c.b16 %v633, %v629
    %v974 = vpack.c.b16 %v634, %v630
    %v975 = vpack.c.b16 %v639, %v635
    %v976 = vpack.c.b16 %v640, %v636
    %v977 = vpack.c.b16 %v641, %v637
    %v978 = vpack.c.b16 %v642, %v638
    %v979 = vpack.c.b16 %v647, %v643
    %v980 = vpack.c.b16 %v648, %v644
    %v981 = vpack.c.b16 %v649, %v645
    %v982 = vpack.c.b16 %v650, %v646
    %v983 = vpack.c.b16 %v655, %v651
    %v984 = vpack.c.b16 %v656, %v652
    %v985 = vpack.c.b16 %v657, %v653
    %v986 = vpack.c.b16 %v658, %v654
    %v987 = vpack.c.b16 %v663, %v659
    %v988 = vpack.c.b16 %v664, %v660
    %v989 = vpack.c.b16 %v665, %v661
    %v990 = vpack.c.b16 %v666, %v662
    %v991 = vpack.c.b16 %v671, %v667
    %v992 = vpack.c.b16 %v672, %v668
    %v993 = vpack.c.b16 %v673, %v669
    %v994 = vpack.c.b16 %v674, %v670
    %v995 = vpack.c.b16 %v679, %v675
    %v996 = vpack.c.b16 %v680, %v676
    %v997 = vpack.c.b16 %v681, %v677
    %v998 = vpack.c.b16 %v682, %v678
    %v999 = vpack.c.b16 %v687, %v683
    %v1000 = vpack.c.b16 %v688, %v684
    %v1001 = vpack.c.b16 %v689, %v685
    %v1002 = vpack.c.b16 %v690, %v686
    %v1003 = vpack.c.b16 %v695, %v691
    %v1004 = vpack.c.b16 %v696, %v692
    %v1005 = vpack.c.b16 %v697, %v693
    %v1006 = vpack.c.b16 %v698, %v694
    %v1007 = vpack.c.b16 %v703, %v699
    %v1008 = vpack.c.b16 %v704, %v700
    %v1009 = vpack.c.b16 %v705, %v701
    %v1010 = vpack.c.b16 %v706, %v702
    %v1011 = vpack.c.b16 %v711, %v707
    %v1012 = vpack.c.b16 %v712, %v708
    %v1013 = vpack.c.b16 %v713, %v709
    %v1014 = vpack.c.b16 %v714, %v710
    %v1015 = vpack.c.b16 %v719, %v715
    %v1016 = vpack.c.b16 %v720, %v716
    %v1017 = vpack.c.b16 %v721, %v717
    %v1018 = vpack.c.b16 %v722, %v718
    %v1019 = vpack.c.b16 %v727, %v723
    %v1020 = vpack.c.b16 %v728, %v724
    %v1021 = vpack.c.b16 %v729, %v725
    %v1022 = vpack.c.b16 %v730, %v726
    %v1023 = vpack.c.b16 %v735, %v731
    %v1024 = vpack.c.b16 %v736, %v732
    %v1025 = vpack.c.b16 %v737, %v733
    %v1026 = vpack.c.b16 %v738, %v734
    %v1027 = vpack.c.b16 %v743, %v739
    %v1028 = vpack.c.b16 %v744, %v740
    %v1029 = vpack.c.b16 %v745, %v741
    %v1030 = vpack.c.b16 %v746, %v742
    %v1031 = vpack.c.b16 %v751, %v747
    %v1032 = vpack.c.b16 %v752, %v748
    %v1033 = vpack.c.b16 %v753, %v749
    %v1034 = vpack.c.b16 %v754, %v750
    %v1035 = vpack.c.b16 %v759, %v755
    %v1036 = vpack.c.b16 %v760, %v756
    %v1037 = vpack.c.b16 %v761, %v757
    %v1038 = vpack.c.b16 %v762, %v758
    %v1039 = vpack.c.b16 %v767, %v763
    %v1040 = vpack.c.b16 %v768, %v764
    %v1041 = vpack.c.b16 %v769, %v765
    %v1042 = vpack.c.b16 %v770, %v766
    %v1043 = vpack.c.b16 %v775, %v771
    %v1044 = vpack.c.b16 %v776, %v772
    %v1045 = vpack.c.b16 %v777, %v773
    %v1046 = vpack.c.b16 %v778, %v774
    %v1047 = vpack.c.b16 %v783, %v779
    %v1048 = vpack.c.b16 %v784, %v780
    %v1049 = vpack.c.b16 %v785, %v781
    %v1050 = vpack.c.b16 %v786, %v782
    %v1051 = vpack.c.b16 %v791, %v787
    %v1052 = vpack.c.b16 %v792, %v788
    %v1053 = vpack.c.b16 %v793, %v789
    %v1054 = vpack.c.b16 %v794, %v790
    %v1055 = vpack.c.b16 %v799, %v795
    %v1056 = vpack.c.b16 %v800, %v796
    %v1057 = vpack.c.b16 %v801, %v797
    %v1058 = vpack.c.b16 %v802, %v798
    %v1059 = vpack.c.b16 %v807, %v803
    %v1060 = vpack.c.b16 %v808, %v804
    %v1061 = vpack.c.b16 %v809, %v805
    %v1062 = vpack.c.b16 %v810, %v806
    %v1063 = vpack.c.b16 %v815, %v811
    %v1064 = vpack.c.b16 %v816, %v812
    %v1065 = vpack.c.b16 %v817, %v813
    %v1066 = vpack.c.b16 %v818, %v814
    %v1067 = vpack.c.b16 %v823, %v819
    %v1068 = vpack.c.b16 %v824, %v820
    %v1069 = vpack.c.b16 %v825, %v821
    %v1070 = vpack.c.b16 %v826, %v822
    %v1071 = vpack.c.b16 %v831, %v827
    %v1072 = vpack.c.b16 %v832, %v828
    %v1073 = vpack.c.b16 %v833, %v829
    %v1074 = vpack.c.b16 %v834, %v830
    %v1075 = vpack.c.b16 %v839, %v835
    %v1076 = vpack.c.b16 %v840, %v836
    %v1077 = vpack.c.b16 %v841, %v837
    %v1078 = vpack.c.b16 %v842, %v838
    %v1079 = vpack.c.b16 %v847, %v843
    %v1080 = vpack.c.b16 %v848, %v844
    %v1081 = vpack.c.b16 %v849, %v845
    %v1082 = vpack.c.b16 %v850, %v846
    %v1083 = vpack.c.b16 %v855, %v851
    %v1084 = vpack.c.b16 %v856, %v852
    %v1085 = vpack.c.b16 %v857, %v853
    %v1086 = vpack.c.b16 %v858, %v854
    %v1087 = vpack.c.b16 %v863, %v859
    %v1088 = vpack.c.b16 %v864, %v860
    %v1089 = vpack.c.b16 %v865, %v861
    %v1090 = vpack.c.b16 %v866, %v862
    %v1091 = vpack.c.b16 %v871, %v867
    %v1092 = vpack.c.b16 %v872, %v868
    %v1093 = vpack.c.b16 %v873, %v869
    %v1094 = vpack.c.b16 %v874, %v870
    %v1095 = vpack.c.b16 %v879, %v875
    %v1096 = vpack.c.b16 %v880, %v876
    %v1097 = vpack.c.b16 %v881, %v877
    %v1098 = vpack.c.b16 %v882, %v878
    %v1099 = vpack.c.b16 %v887, %v883
    %v1100 = vpack.c.b16 %v888, %v884
    %v1101 = vpack.c.b16 %v889, %v885
    %v1102 = vpack.c.b16 %v890, %v886
    %v1103 = vpack.c.b16 %v895, %v891
    %v1104 = vpack.c.b16 %v896, %v892
    %v1105 = vpack.c.b16 %v897, %v893
    %v1106 = vpack.c.b16 %v898, %v894
    %v1107 = vpack.c.b16 %v903, %v899
    %v1108 = vpack.c.b16 %v904, %v900
    %v1109 = vpack.c.b16 %v905, %v901
    %v1110 = vpack.c.b16 %v906, %v902
    %v1111 = vpack.c.b16 %v911, %v907
    %v1112 = vpack.c.b16 %v912, %v908
    %v1113 = vpack.c.b16 %v913, %v909
    %v1114 = vpack.c.b16 %v914, %v910
    %v1115 = vpack.c.b16 %v919, %v915
    %v1116 = vpack.c.b16 %v920, %v916
    %v1117 = vpack.c.b16 %v921, %v917
    %v1118 = vpack.c.b16 %v922, %v918
    %vm1315 = vcmask 130048
    %v1317 = vsel %vm1315, %v116, 0
    %1319 = vmatprep.subr.bf16.mxu0 %v952
    %1320 = vmatpush1.bf16.msra.mxu0 %v951
    %1321 = vmatprep.subr.bf16.mxu0 %v948
    %1322 = vmatpush1.bf16.msra.mxu0 %v947
    %1323 = vmatprep.subr.bf16.mxu0 %v944
    %1324 = vmatpush1.bf16.msra.mxu0 %v943
    %1325 = vmatprep.subr.bf16.mxu0 %v940
    %1326 = vmatpush1.bf16.msra.mxu0 %v939
    %1327 = vmatprep.subr.bf16.mxu0 %v936
    %1328 = vmatpush1.bf16.msra.mxu0 %v935
    %1329 = vmatprep.subr.bf16.mxu0 %v932
    %1330 = vmatpush1.bf16.msra.mxu0 %v931
    %1331 = vmatprep.subr.bf16.mxu0 %v928
    %1332 = vmatpush1.bf16.msra.mxu0 %v927
    %1333 = vmatprep.subr.bf16.mxu0 %v924
    %1334 = vmatpush1.bf16.msra.mxu0 %v923
    %1335 = vmatprep.subr.bf16.mxu0 %v984
    %1336 = vmatpush2.bf16.msra.mxu0 %v983
    %1337 = vmatprep.subr.bf16.mxu0 %v980
    %1338 = vmatpush2.bf16.msra.mxu0 %v979
    %1339 = vmatprep.subr.bf16.mxu0 %v976
    %1340 = vmatpush2.bf16.msra.mxu0 %v975
    %1341 = vmatprep.subr.bf16.mxu0 %v972
    %1342 = vmatpush2.bf16.msra.mxu0 %v971
    %1343 = vmatprep.subr.bf16.mxu0 %v968
    %1344 = vmatpush2.bf16.msra.mxu0 %v967
    %1345 = vmatprep.subr.bf16.mxu0 %v964
    %1346 = vmatpush2.bf16.msra.mxu0 %v963
    %1347 = vmatprep.subr.bf16.mxu0 %v960
    %1348 = vmatpush2.bf16.msra.mxu0 %v959
    %1349 = vmatprep.subr.bf16.mxu0 %v956
    %1350 = vmatpush2.bf16.msra.mxu0 %v955
    %1351 = vmatprep.mubr.bf16.mxu0 %v111
    %1352 = vmatmul.mubr.bf16.gmra.mxu0 %v110
    %v1353 = vpop.f32.mrf.mxu0
    %v1354 = vadd.f32 %v318, %v1353
    %v1355 = vpop.f32.mrf.mxu0
    %v1356 = vadd.f32 %v322, %v1355
    %v1357 = vpop.f32.mrf.mxu0
    %v1358 = vpop.f32.mrf.mxu0
    %1359 = vdwg.mxu0
    %1360 = vmatprep.subr.bf16.mxu0 %v1016
    %1361 = vmatpush1.bf16.msra.mxu0 %v1015
    %1362 = vmatprep.subr.bf16.mxu0 %v1012
    %1363 = vmatpush1.bf16.msra.mxu0 %v1011
    %1364 = vmatprep.subr.bf16.mxu0 %v1008
    %1365 = vmatpush1.bf16.msra.mxu0 %v1007
    %1366 = vmatprep.subr.bf16.mxu0 %v1004
    %1367 = vmatpush1.bf16.msra.mxu0 %v1003
    %1368 = vmatprep.subr.bf16.mxu0 %v1000
    %1369 = vmatpush1.bf16.msra.mxu0 %v999
    %1370 = vmatprep.subr.bf16.mxu0 %v996
    %1371 = vmatpush1.bf16.msra.mxu0 %v995
    %1372 = vmatprep.subr.bf16.mxu0 %v992
    %1373 = vmatpush1.bf16.msra.mxu0 %v991
    %1374 = vmatprep.subr.bf16.mxu0 %v988
    %1375 = vmatpush1.bf16.msra.mxu0 %v987
    %1376 = vmatprep.subr.bf16.mxu0 %v1048
    %1377 = vmatpush2.bf16.msra.mxu0 %v1047
    %1378 = vmatprep.subr.bf16.mxu0 %v1044
    %1379 = vmatpush2.bf16.msra.mxu0 %v1043
    %1380 = vmatprep.subr.bf16.mxu0 %v1040
    %1381 = vmatpush2.bf16.msra.mxu0 %v1039
    %1382 = vmatprep.subr.bf16.mxu0 %v1036
    %1383 = vmatpush2.bf16.msra.mxu0 %v1035
    %1384 = vmatprep.subr.bf16.mxu0 %v1032
    %1385 = vmatpush2.bf16.msra.mxu0 %v1031
    %1386 = vmatprep.subr.bf16.mxu0 %v1028
    %1387 = vmatpush2.bf16.msra.mxu0 %v1027
    %1388 = vmatprep.subr.bf16.mxu0 %v1024
    %1389 = vmatpush2.bf16.msra.mxu0 %v1023
    %1390 = vmatprep.subr.bf16.mxu0 %v1020
    %1391 = vmatpush2.bf16.msra.mxu0 %v1019
    %1392 = vmatprep.mubr.bf16.mxu0 %v113
    %1393 = vmatmul.mubr.bf16.gmra.mxu0 %v112
    %v1394 = vpop.f32.mrf.mxu0
    %v1395 = vadd.f32 %v1354, %v1394
    %v1396 = vpop.f32.mrf.mxu0
    %v1397 = vadd.f32 %v1356, %v1396
    %v1398 = vpop.f32.mrf.mxu0
    %v1399 = vpop.f32.mrf.mxu0
    %1400 = vdwg.mxu0
    %1401 = vmatprep.subr.bf16.mxu0 %v1080
    %1402 = vmatpush1.bf16.msra.mxu0 %v1079
    %1403 = vmatprep.subr.bf16.mxu0 %v1076
    %1404 = vmatpush1.bf16.msra.mxu0 %v1075
    %1405 = vmatprep.subr.bf16.mxu0 %v1072
    %1406 = vmatpush1.bf16.msra.mxu0 %v1071
    %1407 = vmatprep.subr.bf16.mxu0 %v1068
    %1408 = vmatpush1.bf16.msra.mxu0 %v1067
    %1409 = vmatprep.subr.bf16.mxu0 %v1064
    %1410 = vmatpush1.bf16.msra.mxu0 %v1063
    %1411 = vmatprep.subr.bf16.mxu0 %v1060
    %1412 = vmatpush1.bf16.msra.mxu0 %v1059
    %1413 = vmatprep.subr.bf16.mxu0 %v1056
    %1414 = vmatpush1.bf16.msra.mxu0 %v1055
    %1415 = vmatprep.subr.bf16.mxu0 %v1052
    %1416 = vmatpush1.bf16.msra.mxu0 %v1051
    %1417 = vmatprep.subr.bf16.mxu0 %v1112
    %1418 = vmatpush2.bf16.msra.mxu0 %v1111
    %1419 = vmatprep.subr.bf16.mxu0 %v1108
    %1420 = vmatpush2.bf16.msra.mxu0 %v1107
    %1421 = vmatprep.subr.bf16.mxu0 %v1104
    %1422 = vmatpush2.bf16.msra.mxu0 %v1103
    %1423 = vmatprep.subr.bf16.mxu0 %v1100
    %1424 = vmatpush2.bf16.msra.mxu0 %v1099
    %1425 = vmatprep.subr.bf16.mxu0 %v1096
    %1426 = vmatpush2.bf16.msra.mxu0 %v1095
    %1427 = vmatprep.subr.bf16.mxu0 %v1092
    %1428 = vmatpush2.bf16.msra.mxu0 %v1091
    %1429 = vmatprep.subr.bf16.mxu0 %v1088
    %1430 = vmatpush2.bf16.msra.mxu0 %v1087
    %1431 = vmatprep.subr.bf16.mxu0 %v1084
    %1432 = vmatpush2.bf16.msra.mxu0 %v1083
    %1433 = vmatprep.mubr.bf16.mxu0 %v115
    %1434 = vmatmul.mubr.bf16.gmra.mxu0 %v114
    %v1435 = vpop.f32.mrf.mxu0
    %v1436 = vadd.f32 %v1395, %v1435
    %v1437 = vpop.f32.mrf.mxu0
    %v1438 = vadd.f32 %v1397, %v1437
    %v1439 = vpop.f32.mrf.mxu0
    %v1440 = vpop.f32.mrf.mxu0
    %1441 = vdwg.mxu0
    %1442 = vmatprep.subr.bf16.mxu0 0
    %1443 = vmatpush1.bf16.msra.mxu0 0
    %1444 = vmatprep.subr.bf16.mxu0 0
    %1445 = vmatpush1.bf16.msra.mxu0 0
    %1446 = vmatprep.subr.bf16.mxu0 0
    %1447 = vmatpush1.bf16.msra.mxu0 0
    %1448 = vmatprep.subr.bf16.mxu0 0
    %1449 = vmatpush1.bf16.msra.mxu0 0
    %1450 = vmatprep.subr.bf16.mxu0 0
    %1451 = vmatpush1.bf16.msra.mxu0 0
    %1452 = vmatprep.subr.bf16.mxu0 0
    %1453 = vmatpush1.bf16.msra.mxu0 0
    %1454 = vmatprep.subr.bf16.mxu0 0
    %1455 = vmatpush1.bf16.msra.mxu0 0
    %1456 = vmatprep.subr.bf16.mxu0 %v1116
    %1457 = vmatpush1.bf16.msra.mxu0 %v1115
    %1458 = vmatprep.subr.bf16.mxu0 0
    %1459 = vmatpush2.bf16.msra.mxu0 0
    %1460 = vmatprep.subr.bf16.mxu0 0
    %1461 = vmatpush2.bf16.msra.mxu0 0
    %1462 = vmatprep.subr.bf16.mxu0 0
    %1463 = vmatpush2.bf16.msra.mxu0 0
    %1464 = vmatprep.subr.bf16.mxu0 0
    %1465 = vmatpush2.bf16.msra.mxu0 0
    %1466 = vmatprep.subr.bf16.mxu0 0
    %1467 = vmatpush2.bf16.msra.mxu0 0
    %1468 = vmatprep.subr.bf16.mxu0 0
    %1469 = vmatpush2.bf16.msra.mxu0 0
    %1470 = vmatprep.subr.bf16.mxu0 0
    %1471 = vmatpush2.bf16.msra.mxu0 0
    %1472 = vmatprep.subr.bf16.mxu0 0
    %1473 = vmatpush2.bf16.msra.mxu0 0
    %1474 = vmatprep.mubr.bf16.mxu0 0
    %1475 = vmatmul.mubr.bf16.gmra.mxu0 %v1317
    %v1476 = vpop.f32.mrf.mxu0
    %v1477 = vadd.f32 %v1436, %v1476
    %v1478 = vpop.f32.mrf.mxu0
    %v1479 = vadd.f32 %v1438, %v1478
    %v1480 = vpop.f32.mrf.mxu0
    %v1481 = vpop.f32.mrf.mxu0
    %1482 = vdwg.mxu0
    %1483 = vmatprep.subr.bf16.mxu0 %v954
    %1484 = vmatpush1.bf16.msra.mxu0 %v953
    %1485 = vmatprep.subr.bf16.mxu0 %v950
    %1486 = vmatpush1.bf16.msra.mxu0 %v949
    %1487 = vmatprep.subr.bf16.mxu0 %v946
    %1488 = vmatpush1.bf16.msra.mxu0 %v945
    %1489 = vmatprep.subr.bf16.mxu0 %v942
    %1490 = vmatpush1.bf16.msra.mxu0 %v941
    %1491 = vmatprep.subr.bf16.mxu0 %v938
    %1492 = vmatpush1.bf16.msra.mxu0 %v937
    %1493 = vmatprep.subr.bf16.mxu0 %v934
    %1494 = vmatpush1.bf16.msra.mxu0 %v933
    %1495 = vmatprep.subr.bf16.mxu0 %v930
    %1496 = vmatpush1.bf16.msra.mxu0 %v929
    %1497 = vmatprep.subr.bf16.mxu0 %v926
    %1498 = vmatpush1.bf16.msra.mxu0 %v925
    %1499 = vmatprep.subr.bf16.mxu0 %v986
    %1500 = vmatpush2.bf16.msra.mxu0 %v985
    %1501 = vmatprep.subr.bf16.mxu0 %v982
    %1502 = vmatpush2.bf16.msra.mxu0 %v981
    %1503 = vmatprep.subr.bf16.mxu0 %v978
    %1504 = vmatpush2.bf16.msra.mxu0 %v977
    %1505 = vmatprep.subr.bf16.mxu0 %v974
    %1506 = vmatpush2.bf16.msra.mxu0 %v973
    %1507 = vmatprep.subr.bf16.mxu0 %v970
    %1508 = vmatpush2.bf16.msra.mxu0 %v969
    %1509 = vmatprep.subr.bf16.mxu0 %v966
    %1510 = vmatpush2.bf16.msra.mxu0 %v965
    %1511 = vmatprep.subr.bf16.mxu0 %v962
    %1512 = vmatpush2.bf16.msra.mxu0 %v961
    %1513 = vmatprep.subr.bf16.mxu0 %v958
    %1514 = vmatpush2.bf16.msra.mxu0 %v957
    %1515 = vmatprep.mubr.bf16.mxu0 %v111
    %1516 = vmatmul.mubr.bf16.gmra.mxu0 %v110
    %v1517 = vpop.f32.mrf.mxu0
    %v1518 = vadd.f32 %v326, %v1517
    %v1519 = vpop.f32.mrf.mxu0
    %v1520 = vadd.f32 %v330, %v1519
    %v1521 = vpop.f32.mrf.mxu0
    %v1522 = vpop.f32.mrf.mxu0
    %1523 = vdwg.mxu0
    %1524 = vmatprep.subr.bf16.mxu0 %v1018
    %1525 = vmatpush1.bf16.msra.mxu0 %v1017
    %1526 = vmatprep.subr.bf16.mxu0 %v1014
    %1527 = vmatpush1.bf16.msra.mxu0 %v1013
    %1528 = vmatprep.subr.bf16.mxu0 %v1010
    %1529 = vmatpush1.bf16.msra.mxu0 %v1009
    %1530 = vmatprep.subr.bf16.mxu0 %v1006
    %1531 = vmatpush1.bf16.msra.mxu0 %v1005
    %1532 = vmatprep.subr.bf16.mxu0 %v1002
    %1533 = vmatpush1.bf16.msra.mxu0 %v1001
    %1534 = vmatprep.subr.bf16.mxu0 %v998
    %1535 = vmatpush1.bf16.msra.mxu0 %v997
    %1536 = vmatprep.subr.bf16.mxu0 %v994
    %1537 = vmatpush1.bf16.msra.mxu0 %v993
    %1538 = vmatprep.subr.bf16.mxu0 %v990
    %1539 = vmatpush1.bf16.msra.mxu0 %v989
    %1540 = vmatprep.subr.bf16.mxu0 %v1050
    %1541 = vmatpush2.bf16.msra.mxu0 %v1049
    %1542 = vmatprep.subr.bf16.mxu0 %v1046
    %1543 = vmatpush2.bf16.msra.mxu0 %v1045
    %1544 = vmatprep.subr.bf16.mxu0 %v1042
    %1545 = vmatpush2.bf16.msra.mxu0 %v1041
    %1546 = vmatprep.subr.bf16.mxu0 %v1038
    %1547 = vmatpush2.bf16.msra.mxu0 %v1037
    %1548 = vmatprep.subr.bf16.mxu0 %v1034
    %1549 = vmatpush2.bf16.msra.mxu0 %v1033
    %1550 = vmatprep.subr.bf16.mxu0 %v1030
    %1551 = vmatpush2.bf16.msra.mxu0 %v1029
    %1552 = vmatprep.subr.bf16.mxu0 %v1026
    %1553 = vmatpush2.bf16.msra.mxu0 %v1025
    %1554 = vmatprep.subr.bf16.mxu0 %v1022
    %1555 = vmatpush2.bf16.msra.mxu0 %v1021
    %1556 = vmatprep.mubr.bf16.mxu0 %v113
    %1557 = vmatmul.mubr.bf16.gmra.mxu0 %v112
    %v1558 = vpop.f32.mrf.mxu0
    %v1559 = vadd.f32 %v1518, %v1558
    %v1560 = vpop.f32.mrf.mxu0
    %v1561 = vadd.f32 %v1520, %v1560
    %v1562 = vpop.f32.mrf.mxu0
    %v1563 = vpop.f32.mrf.mxu0
    %1564 = vdwg.mxu0
    %1565 = vmatprep.subr.bf16.mxu0 %v1082
    %1566 = vmatpush1.bf16.msra.mxu0 %v1081
    %1567 = vmatprep.subr.bf16.mxu0 %v1078
    %1568 = vmatpush1.bf16.msra.mxu0 %v1077
    %1569 = vmatprep.subr.bf16.mxu0 %v1074
    %1570 = vmatpush1.bf16.msra.mxu0 %v1073
    %1571 = vmatprep.subr.bf16.mxu0 %v1070
    %1572 = vmatpush1.bf16.msra.mxu0 %v1069
    %1573 = vmatprep.subr.bf16.mxu0 %v1066
    %1574 = vmatpush1.bf16.msra.mxu0 %v1065
    %1575 = vmatprep.subr.bf16.mxu0 %v1062
    %1576 = vmatpush1.bf16.msra.mxu0 %v1061
    %1577 = vmatprep.subr.bf16.mxu0 %v1058
    %1578 = vmatpush1.bf16.msra.mxu0 %v1057
    %1579 = vmatprep.subr.bf16.mxu0 %v1054
    %1580 = vmatpush1.bf16.msra.mxu0 %v1053
    %1581 = vmatprep.subr.bf16.mxu0 %v1114
    %1582 = vmatpush2.bf16.msra.mxu0 %v1113
    %1583 = vmatprep.subr.bf16.mxu0 %v1110
    %1584 = vmatpush2.bf16.msra.mxu0 %v1109
    %1585 = vmatprep.subr.bf16.mxu0 %v1106
    %1586 = vmatpush2.bf16.msra.mxu0 %v1105
    %1587 = vmatprep.subr.bf16.mxu0 %v1102
    %1588 = vmatpush2.bf16.msra.mxu0 %v1101
    %1589 = vmatprep.subr.bf16.mxu0 %v1098
    %1590 = vmatpush2.bf16.msra.mxu0 %v1097
    %1591 = vmatprep.subr.bf16.mxu0 %v1094
    %1592 = vmatpush2.bf16.msra.mxu0 %v1093
    %1593 = vmatprep.subr.bf16.mxu0 %v1090
    %1594 = vmatpush2.bf16.msra.mxu0 %v1089
    %1595 = vmatprep.subr.bf16.mxu0 %v1086
    %1596 = vmatpush2.bf16.msra.mxu0 %v1085
    %1597 = vmatprep.mubr.bf16.mxu0 %v115
    %1598 = vmatmul.mubr.bf16.gmra.mxu0 %v114
    %v1599 = vpop.f32.mrf.mxu0
    %v1600 = vadd.f32 %v1559, %v1599
    %v1601 = vpop.f32.mrf.mxu0
    %v1602 = vadd.f32 %v1561, %v1601
    %v1603 = vpop.f32.mrf.mxu0
    %v1604 = vpop.f32.mrf.mxu0
    %1605 = vdwg.mxu0
    %1606 = vmatprep.subr.bf16.mxu0 0
    %1607 = vmatpush1.bf16.msra.mxu0 0
    %1608 = vmatprep.subr.bf16.mxu0 0
    %1609 = vmatpush1.bf16.msra.mxu0 0
    %1610 = vmatprep.subr.bf16.mxu0 0
    %1611 = vmatpush1.bf16.msra.mxu0 0
    %1612 = vmatprep.subr.bf16.mxu0 0
    %1613 = vmatpush1.bf16.msra.mxu0 0
    %1614 = vmatprep.subr.bf16.mxu0 0
    %1615 = vmatpush1.bf16.msra.mxu0 0
    %1616 = vmatprep.subr.bf16.mxu0 0
    %1617 = vmatpush1.bf16.msra.mxu0 0
    %1618 = vmatprep.subr.bf16.mxu0 0
    %1619 = vmatpush1.bf16.msra.mxu0 0
    %1620 = vmatprep.subr.bf16.mxu0 %v1118
    %1621 = vmatpush1.bf16.msra.mxu0 %v1117
    %1622 = vmatprep.subr.bf16.mxu0 0
    %1623 = vmatpush2.bf16.msra.mxu0 0
    %1624 = vmatprep.subr.bf16.mxu0 0
    %1625 = vmatpush2.bf16.msra.mxu0 0
    %1626 = vmatprep.subr.bf16.mxu0 0
    %1627 = vmatpush2.bf16.msra.mxu0 0
    %1628 = vmatprep.subr.bf16.mxu0 0
    %1629 = vmatpush2.bf16.msra.mxu0 0
    %1630 = vmatprep.subr.bf16.mxu0 0
    %1631 = vmatpush2.bf16.msra.mxu0 0
    %1632 = vmatprep.subr.bf16.mxu0 0
    %1633 = vmatpush2.bf16.msra.mxu0 0
    %1634 = vmatprep.subr.bf16.mxu0 0
    %1635 = vmatpush2.bf16.msra.mxu0 0
    %1636 = vmatprep.subr.bf16.mxu0 0
    %1637 = vmatpush2.bf16.msra.mxu0 0
    %1638 = vmatprep.mubr.bf16.mxu0 0
    %1639 = vmatmul.mubr.bf16.gmra.mxu0 %v1317
    %v1640 = vpop.f32.mrf.mxu0
    %v1641 = vadd.f32 %v1600, %v1640
    %v1642 = vpop.f32.mrf.mxu0
    %v1643 = vadd.f32 %v1602, %v1642
    %v1644 = vpop.f32.mrf.mxu0
    %v1645 = vpop.f32.mrf.mxu0
    %1646 = vdwg.mxu0
    %v1647 = vmax.f32 %v1477, 0.0
    %v1648 = vmax.f32 %v1479, 0.0
    %v1649 = vmax.f32 %v1641, 0.0
    %v1650 = vmax.f32 %v1643, 0.0
    %v1651 = vpack.c.bf16 %v1647, %v1647
    %v1652 = vpack.c.bf16 %v1648, %v1648
    %v1653 = vpack.c.bf16 %v1649, %v1649
    %v1654 = vpack.c.bf16 %v1650, %v1650
    %v1655 = vld [vmem:[#allocation7] sm:$0xff]
    %v1656 = vld [vmem:[#allocation7 + $0x8] sm:$0xff]
    %v1657 = vld [vmem:[#allocation7 + $0x10] sm:$0xff]
    %v1658 = vld [vmem:[#allocation7 + $0x18] sm:$0xff]
    %v1659 = vld [vmem:[#allocation7 + $0x20] sm:$0xff]
    %v1660 = vld [vmem:[#allocation7 + $0x28] sm:$0xff]
    %v1661 = vld [vmem:[#allocation7 + $0x30] sm:$0xff]
    %v1662 = vld [vmem:[#allocation7 + $0x38] sm:$0xff]
    %v1663 = vld [vmem:[#allocation7 + $0x40] sm:$0xff]
    %v1664 = vld [vmem:[#allocation7 + $0x48] sm:$0xff]
    %v1665 = vld [vmem:[#allocation7 + $0x50] sm:$0xff]
    %v1666 = vld [vmem:[#allocation7 + $0x58] sm:$0xff]
    %v1667 = vld [vmem:[#allocation7 + $0x60] sm:$0xff]
    %v1668 = vld [vmem:[#allocation7 + $0x68] sm:$0xff]
    %v1669 = vld [vmem:[#allocation7 + $0x70] sm:$0xff]
    %v1670 = vld [vmem:[#allocation7 + $0x78] sm:$0xff]
    %v1671 = vld [vmem:[#allocation7 + $0x80] sm:$0xff]
    %v1672 = vld [vmem:[#allocation7 + $0x88] sm:$0xff]
    %v1673 = vld [vmem:[#allocation7 + $0x90] sm:$0xff]
    %v1674 = vld [vmem:[#allocation7 + $0x98] sm:$0xff]
    %v1675 = vld [vmem:[#allocation7 + $0xa0] sm:$0xff]
    %v1676 = vld [vmem:[#allocation7 + $0xa8] sm:$0xff]
    %v1677 = vld [vmem:[#allocation7 + $0xb0] sm:$0xff]
    %v1678 = vld [vmem:[#allocation7 + $0xb8] sm:$0xff]
    %v1679 = vld [vmem:[#allocation7 + $0xc0] sm:$0xff]
    %v1680 = vld [vmem:[#allocation7 + $0xc8] sm:$0xff]
    %v1681 = vld [vmem:[#allocation7 + $0xd0] sm:$0xff]
    %v1682 = vld [vmem:[#allocation7 + $0xd8] sm:$0xff]
    %v1683 = vld [vmem:[#allocation7 + $0xe0] sm:$0xff]
    %v1684 = vld [vmem:[#allocation7 + $0xe8] sm:$0xff]
    %v1685 = vld [vmem:[#allocation7 + $0xf0] sm:$0xff]
    %v1686 = vld [vmem:[#allocation7 + $0xf8] sm:$0xff]
    %v1687 = vld [vmem:[#allocation7 + $0x100] sm:$0xff]
    %v1688 = vld [vmem:[#allocation7 + $0x108] sm:$0xff]
    %v1689 = vld [vmem:[#allocation7 + $0x110] sm:$0xff]
    %v1690 = vld [vmem:[#allocation7 + $0x118] sm:$0xff]
    %v1691 = vld [vmem:[#allocation7 + $0x120] sm:$0xff]
    %v1692 = vld [vmem:[#allocation7 + $0x128] sm:$0xff]
    %v1693 = vld [vmem:[#allocation7 + $0x130] sm:$0xff]
    %v1694 = vld [vmem:[#allocation7 + $0x138] sm:$0xff]
    %v1695 = vld [vmem:[#allocation7 + $0x140] sm:$0xff]
    %v1696 = vld [vmem:[#allocation7 + $0x148] sm:$0xff]
    %v1697 = vld [vmem:[#allocation7 + $0x150] sm:$0xff]
    %v1698 = vld [vmem:[#allocation7 + $0x158] sm:$0xff]
    %v1699 = vld [vmem:[#allocation7 + $0x160] sm:$0xff]
    %v1700 = vld [vmem:[#allocation7 + $0x168] sm:$0xff]
    %v1701 = vld [vmem:[#allocation7 + $0x170] sm:$0xff]
    %v1702 = vld [vmem:[#allocation7 + $0x178] sm:$0xff]
    %v1703 = vld [vmem:[#allocation7 + $0x180] sm:$0xff]
    %v1704 = vld [vmem:[#allocation7 + $0x188] sm:$0xff]
    %v1705 = vld [vmem:[#allocation7 + $0x190] sm:$0xff]
    %v1706 = vld [vmem:[#allocation7 + $0x198] sm:$0xff]
    %v1707 = vld [vmem:[#allocation7 + $0x1a0] sm:$0xff]
    %v1708 = vld [vmem:[#allocation7 + $0x1a8] sm:$0xff]
    %v1709 = vld [vmem:[#allocation7 + $0x1b0] sm:$0xff]
    %v1710 = vld [vmem:[#allocation7 + $0x1b8] sm:$0xff]
    %v1711 = vld [vmem:[#allocation7 + $0x1c0] sm:$0xff]
    %v1712 = vld [vmem:[#allocation7 + $0x1c8] sm:$0xff]
    %v1713 = vld [vmem:[#allocation7 + $0x1d0] sm:$0xff]
    %v1714 = vld [vmem:[#allocation7 + $0x1d8] sm:$0xff]
    %v1715 = vld [vmem:[#allocation7 + $0x1e0] sm:$0xff]
    %v1716 = vld [vmem:[#allocation7 + $0x1e8] sm:$0xff]
    %v1717 = vld [vmem:[#allocation7 + $0x1f0] sm:$0xff]
    %v1718 = vld [vmem:[#allocation7 + $0x1f8] sm:$0xff]
    %s1719 = scalar_lea.vmem [#allocation11], 1
    %v1720 = vld [vmem:[%s1719] ss:$4 sm:$0x3]
    %v1722 = vlaneseq
    %v1723 = vshrl.u32 %v1722, 7
    %v1724 = vsub.s32 0, %v1723
    %v1725 = vrot.slane %v1720, %v1724
    %v1726 = vlaneseq
    %v1727 = vshrl.u32 %v1726, 7
    %v1728 = vsub.s32 1, %v1727
    %v1729 = vrot.slane %v1720, %v1728
    %v1796 = vunpack.c.l.b16 %v1655
    %v1797 = vunpack.c.h.b16 %v1655
    %v1798 = vunpack.c.l.b16 %v1656
    %v1799 = vunpack.c.h.b16 %v1656
    %v1800 = vunpack.c.l.b16 %v1657
    %v1801 = vunpack.c.h.b16 %v1657
    %v1802 = vunpack.c.l.b16 %v1658
    %v1803 = vunpack.c.h.b16 %v1658
    %v1804 = vunpack.c.l.b16 %v1659
    %v1805 = vunpack.c.h.b16 %v1659
    %v1806 = vunpack.c.l.b16 %v1660
    %v1807 = vunpack.c.h.b16 %v1660
    %v1808 = vunpack.c.l.b16 %v1661
    %v1809 = vunpack.c.h.b16 %v1661
    %v1810 = vunpack.c.l.b16 %v1662
    %v1811 = vunpack.c.h.b16 %v1662
    %v1812 = vunpack.c.l.b16 %v1663
    %v1813 = vunpack.c.h.b16 %v1663
    %v1814 = vunpack.c.l.b16 %v1664
    %v1815 = vunpack.c.h.b16 %v1664
    %v1816 = vunpack.c.l.b16 %v1665
    %v1817 = vunpack.c.h.b16 %v1665
    %v1818 = vunpack.c.l.b16 %v1666
    %v1819 = vunpack.c.h.b16 %v1666
    %v1820 = vunpack.c.l.b16 %v1667
    %v1821 = vunpack.c.h.b16 %v1667
    %v1822 = vunpack.c.l.b16 %v1668
    %v1823 = vunpack.c.h.b16 %v1668
    %v1824 = vunpack.c.l.b16 %v1669
    %v1825 = vunpack.c.h.b16 %v1669
    %v1826 = vunpack.c.l.b16 %v1670
    %v1827 = vunpack.c.h.b16 %v1670
    %v1828 = vunpack.c.l.b16 %v1671
    %v1829 = vunpack.c.h.b16 %v1671
    %v1830 = vunpack.c.l.b16 %v1672
    %v1831 = vunpack.c.h.b16 %v1672
    %v1832 = vunpack.c.l.b16 %v1673
    %v1833 = vunpack.c.h.b16 %v1673
    %v1834 = vunpack.c.l.b16 %v1674
    %v1835 = vunpack.c.h.b16 %v1674
    %v1836 = vunpack.c.l.b16 %v1675
    %v1837 = vunpack.c.h.b16 %v1675
    %v1838 = vunpack.c.l.b16 %v1676
    %v1839 = vunpack.c.h.b16 %v1676
    %v1840 = vunpack.c.l.b16 %v1677
    %v1841 = vunpack.c.h.b16 %v1677
    %v1842 = vunpack.c.l.b16 %v1678
    %v1843 = vunpack.c.h.b16 %v1678
    %v1844 = vunpack.c.l.b16 %v1679
    %v1845 = vunpack.c.h.b16 %v1679
    %v1846 = vunpack.c.l.b16 %v1680
    %v1847 = vunpack.c.h.b16 %v1680
    %v1848 = vunpack.c.l.b16 %v1681
    %v1849 = vunpack.c.h.b16 %v1681
    %v1850 = vunpack.c.l.b16 %v1682
    %v1851 = vunpack.c.h.b16 %v1682
    %v1852 = vunpack.c.l.b16 %v1683
    %v1853 = vunpack.c.h.b16 %v1683
    %v1854 = vunpack.c.l.b16 %v1684
    %v1855 = vunpack.c.h.b16 %v1684
    %v1856 = vunpack.c.l.b16 %v1685
    %v1857 = vunpack.c.h.b16 %v1685
    %v1858 = vunpack.c.l.b16 %v1686
    %v1859 = vunpack.c.h.b16 %v1686
    %v1860 = vunpack.c.l.b16 %v1687
    %v1861 = vunpack.c.h.b16 %v1687
    %v1862 = vunpack.c.l.b16 %v1688
    %v1863 = vunpack.c.h.b16 %v1688
    %v1864 = vunpack.c.l.b16 %v1689
    %v1865 = vunpack.c.h.b16 %v1689
    %v1866 = vunpack.c.l.b16 %v1690
    %v1867 = vunpack.c.h.b16 %v1690
    %v1868 = vunpack.c.l.b16 %v1691
    %v1869 = vunpack.c.h.b16 %v1691
    %v1870 = vunpack.c.l.b16 %v1692
    %v1871 = vunpack.c.h.b16 %v1692
    %v1872 = vunpack.c.l.b16 %v1693
    %v1873 = vunpack.c.h.b16 %v1693
    %v1874 = vunpack.c.l.b16 %v1694
    %v1875 = vunpack.c.h.b16 %v1694
    %v1876 = vunpack.c.l.b16 %v1695
    %v1877 = vunpack.c.h.b16 %v1695
    %v1878 = vunpack.c.l.b16 %v1696
    %v1879 = vunpack.c.h.b16 %v1696
    %v1880 = vunpack.c.l.b16 %v1697
    %v1881 = vunpack.c.h.b16 %v1697
    %v1882 = vunpack.c.l.b16 %v1698
    %v1883 = vunpack.c.h.b16 %v1698
    %v1884 = vunpack.c.l.b16 %v1699
    %v1885 = vunpack.c.h.b16 %v1699
    %v1886 = vunpack.c.l.b16 %v1700
    %v1887 = vunpack.c.h.b16 %v1700
    %v1888 = vunpack.c.l.b16 %v1701
    %v1889 = vunpack.c.h.b16 %v1701
    %v1890 = vunpack.c.l.b16 %v1702
    %v1891 = vunpack.c.h.b16 %v1702
    %v1892 = vunpack.c.l.b16 %v1703
    %v1893 = vunpack.c.h.b16 %v1703
    %v1894 = vunpack.c.l.b16 %v1704
    %v1895 = vunpack.c.h.b16 %v1704
    %v1896 = vunpack.c.l.b16 %v1705
    %v1897 = vunpack.c.h.b16 %v1705
    %v1898 = vunpack.c.l.b16 %v1706
    %v1899 = vunpack.c.h.b16 %v1706
    %v1900 = vunpack.c.l.b16 %v1707
    %v1901 = vunpack.c.h.b16 %v1707
    %v1902 = vunpack.c.l.b16 %v1708
    %v1903 = vunpack.c.h.b16 %v1708
    %v1904 = vunpack.c.l.b16 %v1709
    %v1905 = vunpack.c.h.b16 %v1709
    %v1906 = vunpack.c.l.b16 %v1710
    %v1907 = vunpack.c.h.b16 %v1710
    %v1908 = vunpack.c.l.b16 %v1711
    %v1909 = vunpack.c.h.b16 %v1711
    %v1910 = vunpack.c.l.b16 %v1712
    %v1911 = vunpack.c.h.b16 %v1712
    %v1912 = vunpack.c.l.b16 %v1713
    %v1913 = vunpack.c.h.b16 %v1713
    %v1914 = vunpack.c.l.b16 %v1714
    %v1915 = vunpack.c.h.b16 %v1714
    %v1916 = vunpack.c.l.b16 %v1715
    %v1917 = vunpack.c.h.b16 %v1715
    %v1918 = vunpack.c.l.b16 %v1716
    %v1919 = vunpack.c.h.b16 %v1716
    %v1920 = vunpack.c.l.b16 %v1717
    %v1921 = vunpack.c.h.b16 %v1717
    %v1922 = vunpack.c.l.b16 %v1718
    %v1923 = vunpack.c.h.b16 %v1718
    %v1924 = vpack.c.b16 %v1798, %v1796
    %v1925 = vpack.c.b16 %v1799, %v1797
    %v1926 = vpack.c.b16 %v1802, %v1800
    %v1927 = vpack.c.b16 %v1803, %v1801
    %v1928 = vpack.c.b16 %v1806, %v1804
    %v1929 = vpack.c.b16 %v1807, %v1805
    %v1930 = vpack.c.b16 %v1810, %v1808
    %v1931 = vpack.c.b16 %v1811, %v1809
    %v1932 = vpack.c.b16 %v1814, %v1812
    %v1933 = vpack.c.b16 %v1815, %v1813
    %v1934 = vpack.c.b16 %v1818, %v1816
    %v1935 = vpack.c.b16 %v1819, %v1817
    %v1936 = vpack.c.b16 %v1822, %v1820
    %v1937 = vpack.c.b16 %v1823, %v1821
    %v1938 = vpack.c.b16 %v1826, %v1824
    %v1939 = vpack.c.b16 %v1827, %v1825
    %v1940 = vpack.c.b16 %v1830, %v1828
    %v1941 = vpack.c.b16 %v1831, %v1829
    %v1942 = vpack.c.b16 %v1834, %v1832
    %v1943 = vpack.c.b16 %v1835, %v1833
    %v1944 = vpack.c.b16 %v1838, %v1836
    %v1945 = vpack.c.b16 %v1839, %v1837
    %v1946 = vpack.c.b16 %v1842, %v1840
    %v1947 = vpack.c.b16 %v1843, %v1841
    %v1948 = vpack.c.b16 %v1846, %v1844
    %v1949 = vpack.c.b16 %v1847, %v1845
    %v1950 = vpack.c.b16 %v1850, %v1848
    %v1951 = vpack.c.b16 %v1851, %v1849
    %v1952 = vpack.c.b16 %v1854, %v1852
    %v1953 = vpack.c.b16 %v1855, %v1853
    %v1954 = vpack.c.b16 %v1858, %v1856
    %v1955 = vpack.c.b16 %v1859, %v1857
    %v1956 = vpack.c.b16 %v1862, %v1860
    %v1957 = vpack.c.b16 %v1863, %v1861
    %v1958 = vpack.c.b16 %v1866, %v1864
    %v1959 = vpack.c.b16 %v1867, %v1865
    %v1960 = vpack.c.b16 %v1870, %v1868
    %v1961 = vpack.c.b16 %v1871, %v1869
    %v1962 = vpack.c.b16 %v1874, %v1872
    %v1963 = vpack.c.b16 %v1875, %v1873
    %v1964 = vpack.c.b16 %v1878, %v1876
    %v1965 = vpack.c.b16 %v1879, %v1877
    %v1966 = vpack.c.b16 %v1882, %v1880
    %v1967 = vpack.c.b16 %v1883, %v1881
    %v1968 = vpack.c.b16 %v1886, %v1884
    %v1969 = vpack.c.b16 %v1887, %v1885
    %v1970 = vpack.c.b16 %v1890, %v1888
    %v1971 = vpack.c.b16 %v1891, %v1889
    %v1972 = vpack.c.b16 %v1894, %v1892
    %v1973 = vpack.c.b16 %v1895, %v1893
    %v1974 = vpack.c.b16 %v1898, %v1896
    %v1975 = vpack.c.b16 %v1899, %v1897
    %v1976 = vpack.c.b16 %v1902, %v1900
    %v1977 = vpack.c.b16 %v1903, %v1901
    %v1978 = vpack.c.b16 %v1906, %v1904
    %v1979 = vpack.c.b16 %v1907, %v1905
    %v1980 = vpack.c.b16 %v1910, %v1908
    %v1981 = vpack.c.b16 %v1911, %v1909
    %v1982 = vpack.c.b16 %v1914, %v1912
    %v1983 = vpack.c.b16 %v1915, %v1913
    %v1984 = vpack.c.b16 %v1918, %v1916
    %v1985 = vpack.c.b16 %v1919, %v1917
    %v1986 = vpack.c.b16 %v1922, %v1920
    %v1987 = vpack.c.b16 %v1923, %v1921
    %2052 = vmatprep.subr.bf16.mxu0 %v1939
    %2053 = vmatpush1.bf16.msra.mxu0 %v1938
    %2054 = vmatprep.subr.bf16.mxu0 %v1937
    %2055 = vmatpush1.bf16.msra.mxu0 %v1936
    %2056 = vmatprep.subr.bf16.mxu0 %v1935
    %2057 = vmatpush1.bf16.msra.mxu0 %v1934
    %2058 = vmatprep.subr.bf16.mxu0 %v1933
    %2059 = vmatpush1.bf16.msra.mxu0 %v1932
    %2060 = vmatprep.subr.bf16.mxu0 %v1931
    %2061 = vmatpush1.bf16.msra.mxu0 %v1930
    %2062 = vmatprep.subr.bf16.mxu0 %v1929
    %2063 = vmatpush1.bf16.msra.mxu0 %v1928
    %2064 = vmatprep.subr.bf16.mxu0 %v1927
    %2065 = vmatpush1.bf16.msra.mxu0 %v1926
    %2066 = vmatprep.subr.bf16.mxu0 %v1925
    %2067 = vmatpush1.bf16.msra.mxu0 %v1924
    %2068 = vmatprep.subr.bf16.mxu0 %v1955
    %2069 = vmatpush2.bf16.msra.mxu0 %v1954
    %2070 = vmatprep.subr.bf16.mxu0 %v1953
    %2071 = vmatpush2.bf16.msra.mxu0 %v1952
    %2072 = vmatprep.subr.bf16.mxu0 %v1951
    %2073 = vmatpush2.bf16.msra.mxu0 %v1950
    %2074 = vmatprep.subr.bf16.mxu0 %v1949
    %2075 = vmatpush2.bf16.msra.mxu0 %v1948
    %2076 = vmatprep.subr.bf16.mxu0 %v1947
    %2077 = vmatpush2.bf16.msra.mxu0 %v1946
    %2078 = vmatprep.subr.bf16.mxu0 %v1945
    %2079 = vmatpush2.bf16.msra.mxu0 %v1944
    %2080 = vmatprep.subr.bf16.mxu0 %v1943
    %2081 = vmatpush2.bf16.msra.mxu0 %v1942
    %2082 = vmatprep.subr.bf16.mxu0 %v1941
    %2083 = vmatpush2.bf16.msra.mxu0 %v1940
    %2084 = vmatprep.mubr.bf16.mxu0 %v1652
    %2085 = vmatmul.mubr.bf16.gmra.mxu0 %v1651
    %v2086 = vpop.f32.mrf.mxu0
    %v2087 = vadd.f32 %v1725, %v2086
    %v2088 = vpop.f32.mrf.mxu0
    %v2089 = vadd.f32 %v1729, %v2088
    %v2090 = vpop.f32.mrf.mxu0
    %v2091 = vpop.f32.mrf.mxu0
    %2092 = vdwg.mxu0
    %2093 = vmatprep.subr.bf16.mxu0 %v1971
    %2094 = vmatpush1.bf16.msra.mxu0 %v1970
    %2095 = vmatprep.subr.bf16.mxu0 %v1969
    %2096 = vmatpush1.bf16.msra.mxu0 %v1968
    %2097 = vmatprep.subr.bf16.mxu0 %v1967
    %2098 = vmatpush1.bf16.msra.mxu0 %v1966
    %2099 = vmatprep.subr.bf16.mxu0 %v1965
    %2100 = vmatpush1.bf16.msra.mxu0 %v1964
    %2101 = vmatprep.subr.bf16.mxu0 %v1963
    %2102 = vmatpush1.bf16.msra.mxu0 %v1962
    %2103 = vmatprep.subr.bf16.mxu0 %v1961
    %2104 = vmatpush1.bf16.msra.mxu0 %v1960
    %2105 = vmatprep.subr.bf16.mxu0 %v1959
    %2106 = vmatpush1.bf16.msra.mxu0 %v1958
    %2107 = vmatprep.subr.bf16.mxu0 %v1957
    %2108 = vmatpush1.bf16.msra.mxu0 %v1956
    %2109 = vmatprep.subr.bf16.mxu0 %v1987
    %2110 = vmatpush2.bf16.msra.mxu0 %v1986
    %2111 = vmatprep.subr.bf16.mxu0 %v1985
    %2112 = vmatpush2.bf16.msra.mxu0 %v1984
    %2113 = vmatprep.subr.bf16.mxu0 %v1983
    %2114 = vmatpush2.bf16.msra.mxu0 %v1982
    %2115 = vmatprep.subr.bf16.mxu0 %v1981
    %2116 = vmatpush2.bf16.msra.mxu0 %v1980
    %2117 = vmatprep.subr.bf16.mxu0 %v1979
    %2118 = vmatpush2.bf16.msra.mxu0 %v1978
    %2119 = vmatprep.subr.bf16.mxu0 %v1977
    %2120 = vmatpush2.bf16.msra.mxu0 %v1976
    %2121 = vmatprep.subr.bf16.mxu0 %v1975
    %2122 = vmatpush2.bf16.msra.mxu0 %v1974
    %2123 = vmatprep.subr.bf16.mxu0 %v1973
    %2124 = vmatpush2.bf16.msra.mxu0 %v1972
    %2125 = vmatprep.mubr.bf16.mxu0 %v1654
    %2126 = vmatmul.mubr.bf16.gmra.mxu0 %v1653
    %v2127 = vpop.f32.mrf.mxu0
    %v2128 = vadd.f32 %v2087, %v2127
    %v2129 = vpop.f32.mrf.mxu0
    %v2130 = vadd.f32 %v2089, %v2129
    %v2131 = vpop.f32.mrf.mxu0
    %v2132 = vpop.f32.mrf.mxu0
    %2133 = vdwg.mxu0
    %v2134 = vmax.f32 %v2128, 0.0
    %v2135 = vmax.f32 %v2130, 0.0
    %v2136 = vpack.c.bf16 %v2134, %v2134
    %v2137 = vpack.c.bf16 %v2135, %v2135
    %v2138 = vld [vmem:[#allocation8] sm:$0xf]
    %v2139 = vld [vmem:[#allocation8 + $0x4] sm:$0xf]
    %v2140 = vld [vmem:[#allocation8 + $0x8] sm:$0xf]
    %v2141 = vld [vmem:[#allocation8 + $0xc] sm:$0xf]
    %v2142 = vld [vmem:[#allocation8 + $0x10] sm:$0xf]
    %v2143 = vld [vmem:[#allocation8 + $0x14] sm:$0xf]
    %v2144 = vld [vmem:[#allocation8 + $0x18] sm:$0xf]
    %v2145 = vld [vmem:[#allocation8 + $0x1c] sm:$0xf]
    %v2146 = vld [vmem:[#allocation8 + $0x20] sm:$0xf]
    %v2147 = vld [vmem:[#allocation8 + $0x24] sm:$0xf]
    %v2148 = vld [vmem:[#allocation8 + $0x28] sm:$0xf]
    %v2149 = vld [vmem:[#allocation8 + $0x2c] sm:$0xf]
    %v2150 = vld [vmem:[#allocation8 + $0x30] sm:$0xf]
    %v2151 = vld [vmem:[#allocation8 + $0x34] sm:$0xf]
    %v2152 = vld [vmem:[#allocation8 + $0x38] sm:$0xf]
    %v2153 = vld [vmem:[#allocation8 + $0x3c] sm:$0xf]
    %v2154 = vld [vmem:[#allocation8 + $0x40] sm:$0xf]
    %v2155 = vld [vmem:[#allocation8 + $0x44] sm:$0xf]
    %v2156 = vld [vmem:[#allocation8 + $0x48] sm:$0xf]
    %v2157 = vld [vmem:[#allocation8 + $0x4c] sm:$0xf]
    %v2158 = vld [vmem:[#allocation8 + $0x50] sm:$0xf]
    %v2159 = vld [vmem:[#allocation8 + $0x54] sm:$0xf]
    %v2160 = vld [vmem:[#allocation8 + $0x58] sm:$0xf]
    %v2161 = vld [vmem:[#allocation8 + $0x5c] sm:$0xf]
    %v2162 = vld [vmem:[#allocation8 + $0x60] sm:$0xf]
    %v2163 = vld [vmem:[#allocation8 + $0x64] sm:$0xf]
    %v2164 = vld [vmem:[#allocation8 + $0x68] sm:$0xf]
    %v2165 = vld [vmem:[#allocation8 + $0x6c] sm:$0xf]
    %v2166 = vld [vmem:[#allocation8 + $0x70] sm:$0xf]
    %v2167 = vld [vmem:[#allocation8 + $0x74] sm:$0xf]
    %v2168 = vld [vmem:[#allocation8 + $0x78] sm:$0xf]
    %v2169 = vld [vmem:[#allocation8 + $0x7c] sm:$0xf]
    %v2170 = vld [vmem:[#allocation11 + $0x2] sm:$0x1]
    %v2171 = vlaneseq
    %v2172 = vshrl.u32 %v2171, 7
    %v2173 = vsub.s32 0, %v2172
    %v2174 = vrot.slane %v2170, %v2173
    %v2207 = vunpack.c.l.b16 %v2138
    %v2208 = vunpack.c.l.b16 %v2139
    %v2209 = vunpack.c.l.b16 %v2140
    %v2210 = vunpack.c.l.b16 %v2141
    %v2211 = vunpack.c.l.b16 %v2142
    %v2212 = vunpack.c.l.b16 %v2143
    %v2213 = vunpack.c.l.b16 %v2144
    %v2214 = vunpack.c.l.b16 %v2145
    %v2215 = vunpack.c.l.b16 %v2146
    %v2216 = vunpack.c.l.b16 %v2147
    %v2217 = vunpack.c.l.b16 %v2148
    %v2218 = vunpack.c.l.b16 %v2149
    %v2219 = vunpack.c.l.b16 %v2150
    %v2220 = vunpack.c.l.b16 %v2151
    %v2221 = vunpack.c.l.b16 %v2152
    %v2222 = vunpack.c.l.b16 %v2153
    %v2223 = vunpack.c.l.b16 %v2154
    %v2224 = vunpack.c.l.b16 %v2155
    %v2225 = vunpack.c.l.b16 %v2156
    %v2226 = vunpack.c.l.b16 %v2157
    %v2227 = vunpack.c.l.b16 %v2158
    %v2228 = vunpack.c.l.b16 %v2159
    %v2229 = vunpack.c.l.b16 %v2160
    %v2230 = vunpack.c.l.b16 %v2161
    %v2231 = vunpack.c.l.b16 %v2162
    %v2232 = vunpack.c.l.b16 %v2163
    %v2233 = vunpack.c.l.b16 %v2164
    %v2234 = vunpack.c.l.b16 %v2165
    %v2235 = vunpack.c.l.b16 %v2166
    %v2236 = vunpack.c.l.b16 %v2167
    %v2237 = vunpack.c.l.b16 %v2168
    %v2238 = vunpack.c.l.b16 %v2169
    %v2239 = vpack.c.b16 %v2208, %v2207
    %v2240 = vpack.c.b16 %v2210, %v2209
    %v2241 = vpack.c.b16 %v2212, %v2211
    %v2242 = vpack.c.b16 %v2214, %v2213
    %v2243 = vpack.c.b16 %v2216, %v2215
    %v2244 = vpack.c.b16 %v2218, %v2217
    %v2245 = vpack.c.b16 %v2220, %v2219
    %v2246 = vpack.c.b16 %v2222, %v2221
    %v2247 = vpack.c.b16 %v2224, %v2223
    %v2248 = vpack.c.b16 %v2226, %v2225
    %v2249 = vpack.c.b16 %v2228, %v2227
    %v2250 = vpack.c.b16 %v2230, %v2229
    %v2251 = vpack.c.b16 %v2232, %v2231
    %v2252 = vpack.c.b16 %v2234, %v2233
    %v2253 = vpack.c.b16 %v2236, %v2235
    %v2254 = vpack.c.b16 %v2238, %v2237
    %2271 = vmatprep.subr.bf16.mxu0 0
    %2272 = vmatpush1.bf16.msra.mxu0 %v2246
    %2273 = vmatprep.subr.bf16.mxu0 0
    %2274 = vmatpush1.bf16.msra.mxu0 %v2245
    %2275 = vmatprep.subr.bf16.mxu0 0
    %2276 = vmatpush1.bf16.msra.mxu0 %v2244
    %2277 = vmatprep.subr.bf16.mxu0 0
    %2278 = vmatpush1.bf16.msra.mxu0 %v2243
    %2279 = vmatprep.subr.bf16.mxu0 0
    %2280 = vmatpush1.bf16.msra.mxu0 %v2242
    %2281 = vmatprep.subr.bf16.mxu0 0
    %2282 = vmatpush1.bf16.msra.mxu0 %v2241
    %2283 = vmatprep.subr.bf16.mxu0 0
    %2284 = vmatpush1.bf16.msra.mxu0 %v2240
    %2285 = vmatprep.subr.bf16.mxu0 0
    %2286 = vmatpush1.bf16.msra.mxu0 %v2239
    %2287 = vmatprep.subr.bf16.mxu0 0
    %2288 = vmatpush2.bf16.msra.mxu0 %v2254
    %2289 = vmatprep.subr.bf16.mxu0 0
    %2290 = vmatpush2.bf16.msra.mxu0 %v2253
    %2291 = vmatprep.subr.bf16.mxu0 0
    %2292 = vmatpush2.bf16.msra.mxu0 %v2252
    %2293 = vmatprep.subr.bf16.mxu0 0
    %2294 = vmatpush2.bf16.msra.mxu0 %v2251
    %2295 = vmatprep.subr.bf16.mxu0 0
    %2296 = vmatpush2.bf16.msra.mxu0 %v2250
    %2297 = vmatprep.subr.bf16.mxu0 0
    %2298 = vmatpush2.bf16.msra.mxu0 %v2249
    %2299 = vmatprep.subr.bf16.mxu0 0
    %2300 = vmatpush2.bf16.msra.mxu0 %v2248
    %2301 = vmatprep.subr.bf16.mxu0 0
    %2302 = vmatpush2.bf16.msra.mxu0 %v2247
    %2303 = vmatprep.mubr.bf16.mxu0 %v2137
    %2304 = vmatmul.mubr.bf16.gmra.mxu0 %v2136
    %v2305 = vpop.f32.mrf.mxu0
    %v2306 = vadd.f32 %v2174, %v2305
    %v2307 = vpop.f32.mrf.mxu0
    %v2308 = vpop.f32.mrf.mxu0
    %v2309 = vpop.f32.mrf.mxu0
    %2310 = vdwg.mxu0
    %v2311 = vmax.f32 %v2306, 0.0
    %v2312 = vpack.c.bf16 %v2311, %v2311
    %v2313 = vld [vmem:[#allocation10] sm:$0xf]
    %v2314 = vld [vmem:[#allocation10 + $0x4] sm:$0xf]
    %v2315 = vld [vmem:[#allocation10 + $0x8] sm:$0xf]
    %v2316 = vld [vmem:[#allocation10 + $0xc] sm:$0xf]
    %v2317 = vld [vmem:[#allocation10 + $0x10] sm:$0xf]
    %v2318 = vld [vmem:[#allocation10 + $0x14] sm:$0xf]
    %v2319 = vld [vmem:[#allocation10 + $0x18] sm:$0xf]
    %v2320 = vld [vmem:[#allocation10 + $0x1c] sm:$0xf]
    %v2321 = vld [vmem:[#allocation10 + $0x20] sm:$0xf]
    %v2322 = vld [vmem:[#allocation10 + $0x24] sm:$0xf]
    %v2323 = vld [vmem:[#allocation10 + $0x28] sm:$0xf]
    %v2324 = vld [vmem:[#allocation10 + $0x2c] sm:$0xf]
    %v2325 = vld [vmem:[#allocation10 + $0x30] sm:$0xf]
    %v2326 = vld [vmem:[#allocation10 + $0x34] sm:$0xf]
    %v2327 = vld [vmem:[#allocation10 + $0x38] sm:$0xf]
    %v2328 = vld [vmem:[#allocation10 + $0x3c] sm:$0xf]
    %v2329 = vld [vmem:[#allocation11 + $0x3] sm:$0x1]
    %v2330 = vlaneseq
    %v2331 = vshrl.u32 %v2330, 7
    %v2332 = vsub.s32 0, %v2331
    %v2333 = vrot.slane %v2329, %v2332
    %v2350 = vunpack.c.l.b16 %v2313
    %v2351 = vunpack.c.l.b16 %v2314
    %v2352 = vunpack.c.l.b16 %v2315
    %v2353 = vunpack.c.l.b16 %v2316
    %v2354 = vunpack.c.l.b16 %v2317
    %v2355 = vunpack.c.l.b16 %v2318
    %v2356 = vunpack.c.l.b16 %v2319
    %v2357 = vunpack.c.l.b16 %v2320
    %v2358 = vunpack.c.l.b16 %v2321
    %v2359 = vunpack.c.l.b16 %v2322
    %v2360 = vunpack.c.l.b16 %v2323
    %v2361 = vunpack.c.l.b16 %v2324
    %v2362 = vunpack.c.l.b16 %v2325
    %v2363 = vunpack.c.l.b16 %v2326
    %v2364 = vunpack.c.l.b16 %v2327
    %v2365 = vunpack.c.l.b16 %v2328
    %v2366 = vpack.c.b16 %v2351, %v2350
    %v2367 = vpack.c.b16 %v2353, %v2352
    %v2368 = vpack.c.b16 %v2355, %v2354
    %v2369 = vpack.c.b16 %v2357, %v2356
    %v2370 = vpack.c.b16 %v2359, %v2358
    %v2371 = vpack.c.b16 %v2361, %v2360
    %v2372 = vpack.c.b16 %v2363, %v2362
    %v2373 = vpack.c.b16 %v2365, %v2364
    %2382 = vmatprep.subr.bf16.mxu0 0
    %2383 = vmatpush1.bf16.msra.mxu0 %v2373
    %2384 = vmatprep.subr.bf16.mxu0 0
    %2385 = vmatpush1.bf16.msra.mxu0 %v2372
    %2386 = vmatprep.subr.bf16.mxu0 0
    %2387 = vmatpush1.bf16.msra.mxu0 %v2371
    %2388 = vmatprep.subr.bf16.mxu0 0
    %2389 = vmatpush1.bf16.msra.mxu0 %v2370
    %2390 = vmatprep.subr.bf16.mxu0 0
    %2391 = vmatpush1.bf16.msra.mxu0 %v2369
    %2392 = vmatprep.subr.bf16.mxu0 0
    %2393 = vmatpush1.bf16.msra.mxu0 %v2368
    %2394 = vmatprep.subr.bf16.mxu0 0
    %2395 = vmatpush1.bf16.msra.mxu0 %v2367
    %2396 = vmatprep.subr.bf16.mxu0 0
    %2397 = vmatpush1.bf16.msra.mxu0 %v2366
    %2398 = vmatprep.subr.bf16.mxu0 0
    %2399 = vmatpush2.bf16.msra.mxu0 0
    %2400 = vmatprep.subr.bf16.mxu0 0
    %2401 = vmatpush2.bf16.msra.mxu0 0
    %2402 = vmatprep.subr.bf16.mxu0 0
    %2403 = vmatpush2.bf16.msra.mxu0 0
    %2404 = vmatprep.subr.bf16.mxu0 0
    %2405 = vmatpush2.bf16.msra.mxu0 0
    %2406 = vmatprep.subr.bf16.mxu0 0
    %2407 = vmatpush2.bf16.msra.mxu0 0
    %2408 = vmatprep.subr.bf16.mxu0 0
    %2409 = vmatpush2.bf16.msra.mxu0 0
    %2410 = vmatprep.subr.bf16.mxu0 0
    %2411 = vmatpush2.bf16.msra.mxu0 0
    %2412 = vmatprep.subr.bf16.mxu0 0
    %2413 = vmatpush2.bf16.msra.mxu0 0
    %2414 = vmatprep.mubr.bf16.mxu0 0
    %2415 = vmatmul.mubr.bf16.gmra.mxu0 %v2312
    %v2416 = vpop.f32.mrf.mxu0
    %v2417 = vadd.f32 %v2333, %v2416
    %v2418 = vpop.f32.mrf.mxu0
    %v2419 = vpop.f32.mrf.mxu0
    %v2420 = vpop.f32.mrf.mxu0
    %2421 = vdwg.mxu0
    %2422 = vst [vmem:[#allocation13] sm:$0xff] %v2417
    // Predicated region
    $region50: #{encoder_forward.1} parent=1 // pred_check
      _
    $region51: #{encoder_forward.1} parent=1 // pred_check_branch
      %2424 = sbr.rel (0) target = $region53
    $region52: #{encoder_forward.1} parent=1 // pred_region
      %s2426 = ssub.s32 128, 128
      %2427 = vsyncadd [#allocation4], %s2426
      %s2429 = sshll.u32 [#allocation13], 4
      %s2430 = int_to_ptr.vmem [resolvable:$true] %s2429
      %2432 = dma.vmem_to_hbm [thread:$0]  %s2430, 128, %s6, [#allocation4]
    $region53: #{encoder_forward.1} parent=1 // pred_fallthru
      _
    // Predicated region
    $region54: #{encoder_forward.1} parent=1 // pred_check
      _
    $region55: #{encoder_forward.1} parent=1 // pred_check_branch
      %2434 = sbr.rel (0) target = $region57
    $region56: #{encoder_forward.1} parent=1 // pred_region
      %2435 = dma.done [#allocation4], 128
    $region57: #{encoder_forward.1} parent=1 // pred_fallthru
      _
    %2436 = vsyncpa [#allocation3], 1
    %2437 = vsyncpa [#allocation6], 1
    %2438 = vsyncpa [#allocation9], 1
    %2439 = vsyncpa [#allocation12], 1
    %2440 = vsyncpa [#allocation4], 1

</llo_original>
